<compile_context>
chip_gen: v6e
topology: v6e:2x2x1
jax: 0.10.0
libtpu: 0.0.40
codegen_flags: <defaults>
</compile_context>

<pallas_src>
import functools

import jax
import jax.numpy as jnp
from jax.experimental import pallas as pl
from jax.experimental.pallas import tpu as pltpu


def _sepconv_kernel(x_ref, dww_ref, dwb_ref, pww_ref, pwb_ref, o_ref, xpad_ref, *,
                    k, stride, padding, tile_h, w_out, pc_in, pc_out, b_imgs):
    # ---- ReLU + zero padding, staged in a VMEM scratch (relu(0) == 0). ------
    h_in, w_in = x_ref.shape[1], x_ref.shape[2]
    if padding > 0:
        xpad_ref[...] = jnp.zeros_like(xpad_ref)
    xpad_ref[:, padding:padding + h_in, padding:padding + w_in, :] = (
        jnp.maximum(x_ref[...], 0.0).astype(xpad_ref.dtype))

    # ---- Depthwise k x k: each tap is a ref-sliced load from the scratch. ---
    # First padded row this h-tile reads (H is a leading, untiled dim).
    row0 = pl.program_id(1) * (tile_h * stride)
    acc = jnp.broadcast_to(dwb_ref[...].astype(jnp.float32),
                           (b_imgs, tile_h, w_out, pc_in))
    for di in range(k):
        for dj in range(k):
            if stride == 1:
                tap = xpad_ref[:, pl.ds(row0 + di, tile_h), pl.ds(dj, w_out), :]
            else:
                tap = xpad_ref[:, pl.ds(row0 + di, tile_h, stride),
                               pl.ds(dj, w_out, stride), :]
            w_tap = dww_ref[pl.ds(di * k + dj, 1), :]            # (1, pc_in)
            acc = acc + tap.astype(jnp.float32) * w_tap.astype(jnp.float32)

    # ---- Pointwise 1x1 on the MXU: bf16 operands, f32 accumulation. ---------
    m = acc.reshape(b_imgs * tile_h * w_out, pc_in).astype(jnp.bfloat16)
    y = jnp.dot(m, pww_ref[...], preferred_element_type=jnp.float32)
    y = y + pwb_ref[...].astype(jnp.float32)                     # (1, pc_out)
    o_ref[...] = y.reshape(b_imgs, tile_h, w_out, pc_out).astype(o_ref.dtype)


def sep_conv(x_nchw, dw_weight, dw_bias, pw_weight, pw_bias, *, stride, padding):
    """SepConv forward (NCHW in/out, PyTorch weight layouts), RELU_FIRST, bn=False."""
    n, c_in, h, w = map(int, x_nchw.shape)
    c_out = int(pw_weight.shape[0])
    k = int(dw_weight.shape[-1])
    h_out = (h + 2 * padding - k) // stride + 1
    w_out = (w + 2 * padding - k) // stride + 1
    h_pad, w_pad = h + 2 * padding, w + 2 * padding
    dtype = x_nchw.dtype
    itemsize = dtype.itemsize

    # Pack P=2 images along the channel (lane) dim: depthwise uses 2*C_in lanes,
    # output block is 2*C_out = 128 lanes (unmasked stores).  P=1 for odd n.
    p = 2 if n % 2 == 0 else 1
    n_pk = n // p
    pc_in, pc_out = p * c_in, p * c_out

    # ---- Choose image-packs per grid step (amortize per-step overhead). -----
    blk_bytes = (h * w * pc_in + h_out * w_out * pc_out) * itemsize   # in+out per pack
    scratch_bytes = h_pad * w_pad * pc_in * 4
    acc_bytes = h_out * w_out * pc_in * 4
    b_imgs = 1
    for d in range(1, n_pk + 1):
        if n_pk % d:
            continue
        if n_pk >= 2 and n_pk // d < 2:
            continue                                    # keep >=2 parallel steps (v7x: 2 TCs)
        if d * (2 * blk_bytes + scratch_bytes) > 10 * 2**20:
            continue                                    # per-step VMEM budget (v7x: 64 MiB total)
        if d * acc_bytes > 96 * 1024:
            continue                                    # keep the f32 accumulator in vregs
        b_imgs = d
    # If the batch alone cannot give 2 parallel steps, split h_out instead.
    # (By construction: n_h_tiles > 1 only when b_imgs == 1.)
    n_h_tiles = 2 if (n_pk // b_imgs < 2 and h_out >= 2 and h_out % 2 == 0) else 1
    tile_h = h_out // n_h_tiles

    # ---- Host-side prep: the activation tensor is touched exactly once on ---
    # ---- each side of the kernel (layout transpose only; no padded copy). ---
    x_pk = jnp.transpose(x_nchw.reshape(n_pk, p, c_in, h, w), (0, 3, 4, 1, 2))
    x_pk = x_pk.reshape(n_pk, h, w, pc_in)

    dw = jnp.transpose(dw_weight.reshape(c_in, k, k), (1, 2, 0)).reshape(k * k, c_in)
    dw_t = jnp.tile(dw, (1, p)).astype(jnp.float32)                    # (k*k, P*C_in)
    dwb_t = jnp.tile(dw_bias.reshape(1, c_in), (1, p)).astype(jnp.float32)

    pw = jnp.transpose(pw_weight.reshape(c_out, c_in), (1, 0))         # (C_in, C_out)
    pw_bd = jnp.kron(jnp.eye(p, dtype=pw.dtype), pw).astype(jnp.bfloat16)  # block-diag
    pwb_t = jnp.tile(pw_bias.reshape(1, c_out), (1, p)).astype(jnp.float32)

    flops = (2 * n * h_out * w_out * k * k * c_in
             + 2 * n_pk * h_out * w_out * pc_in * pc_out)
    act_bytes = (n_pk * h * w * pc_in + n_pk * h_out * w_out * pc_out) * itemsize
    w_bytes = (k * k * pc_in + pc_in + pc_out) * 4 + pc_in * pc_out * 2
    bytes_accessed = act_bytes + w_bytes

    vmem_need = b_imgs * (2 * blk_bytes + scratch_bytes) + 2 * w_bytes + 4096
    vmem_limit = int(min(max(4 * vmem_need, 32 * 2**20), 64 * 2**20))

    kernel = functools.partial(
        _sepconv_kernel, k=k, stride=stride, padding=padding, tile_h=tile_h,
        w_out=w_out, pc_in=pc_in, pc_out=pc_out, b_imgs=b_imgs)

    out_pk = pl.pallas_call(
        kernel,
        out_shape=jax.ShapeDtypeStruct((n_pk, h_out, w_out, pc_out), dtype),
        grid=(n_pk // b_imgs, n_h_tiles),
        in_specs=[
            pl.BlockSpec((b_imgs, h, w, pc_in), lambda b, t: (b, 0, 0, 0)),
            pl.BlockSpec((k * k, pc_in), lambda b, t: (0, 0)),
            pl.BlockSpec((1, pc_in), lambda b, t: (0, 0)),
            pl.BlockSpec((pc_in, pc_out), lambda b, t: (0, 0)),
            pl.BlockSpec((1, pc_out), lambda b, t: (0, 0)),
        ],
        out_specs=pl.BlockSpec((b_imgs, tile_h, w_out, pc_out),
                               lambda b, t: (b, t, 0, 0)),
        scratch_shapes=[pltpu.VMEM((b_imgs, h_pad, w_pad, pc_in), jnp.float32)],
        compiler_params=pltpu.CompilerParams(
            dimension_semantics=("parallel", "parallel"),
            vmem_limit_bytes=vmem_limit),
        cost_estimate=pl.CostEstimate(flops=flops, transcendentals=0,
                                      bytes_accessed=bytes_accessed),
    )(x_pk, dw_t, dwb_t, pw_bd, pwb_t)

    # Unpack (pack, h, w, P*C_out) -> NCHW (single post-kernel pass).
    out = out_pk.reshape(n_pk, h_out, w_out, p, c_out)
    out = jnp.transpose(out, (0, 3, 4, 1, 2)).reshape(n, c_out, h_out, w_out)
    return out


def _reference(x, dw_weight, dw_bias, pw_weight, pw_bias, *, stride, padding,
               mxu_bf16=False):
    """Pure-JAX reference matching PyTorch SepConv (RELU_FIRST, bn=False)."""
    x = jnp.maximum(x, 0.0)
    y = jax.lax.conv_general_dilated(
        x, dw_weight, window_strides=(stride, stride),
        padding=[(padding, padding), (padding, padding)],
        dimension_numbers=("NCHW", "OIHW", "NCHW"),
        feature_group_count=x.shape[1],
        precision=jax.lax.Precision.HIGHEST)
    y = y + dw_bias.reshape(1, -1, 1, 1)
    pw = pw_weight
    if mxu_bf16:   # model the kernel's bf16 MXU operands (f32 accumulation)
        y = y.astype(jnp.bfloat16).astype(jnp.float32)
        pw = pw.astype(jnp.bfloat16).astype(jnp.float32)
    z = jax.lax.conv_general_dilated(
        y, pw, window_strides=(1, 1), padding="VALID",
        dimension_numbers=("NCHW", "OIHW", "NCHW"),
        precision=jax.lax.Precision.HIGHEST)
    return z + pw_bias.reshape(1, -1, 1, 1)


if __name__ == "__main__":
    key = jax.random.PRNGKey(0)
    k0, k1, k2, k3, k4 = jax.random.split(key, 5)

    N, C_IN, C_OUT, H, W = 2, 32, 64, 16, 16
    K, STRIDE, PAD = 3, 1, 1

    x = jax.random.normal(k0, (N, C_IN, H, W), dtype=jnp.float32)
    dw_weight = jax.random.normal(k1, (C_IN, 1, K, K), dtype=jnp.float32) * 0.1
    dw_bias = jax.random.normal(k2, (C_IN,), dtype=jnp.float32) * 0.1
    pw_weight = jax.random.normal(k3, (C_OUT, C_IN, 1, 1), dtype=jnp.float32) * 0.1
    pw_bias = jax.random.normal(k4, (C_OUT,), dtype=jnp.float32) * 0.1

    y = sep_conv(x, dw_weight, dw_bias, pw_weight, pw_bias, stride=STRIDE, padding=PAD)
    y = jax.block_until_ready(y)
    assert y.shape == (N, C_OUT, H, W), y.shape

    # Tight check vs. a reference that models the kernel's bf16 MXU operands.
    y_ref_bf16 = _reference(x, dw_weight, dw_bias, pw_weight, pw_bias,
                            stride=STRIDE, padding=PAD, mxu_bf16=True)
    err_bf16 = float(jnp.max(jnp.abs(y - y_ref_bf16)))
    assert jnp.allclose(y, y_ref_bf16, rtol=2e-3, atol=2e-3), f"max_err_bf16={err_bf16}"

    # Looser check vs. the exact f32 (Precision.HIGHEST) reference -- the gap
    # is the intentional bf16 rounding of the pointwise MXU operands.
    y_ref_f32 = _reference(x, dw_weight, dw_bias, pw_weight, pw_bias,
                           stride=STRIDE, padding=PAD, mxu_bf16=False)
    err_f32 = float(jnp.max(jnp.abs(y - y_ref_f32)))
    assert jnp.allclose(y, y_ref_f32, rtol=3e-2, atol=3e-2), f"max_err_f32={err_f32}"

    print("KERNEL_OK")
</pallas_src>

<mosaic_0001>
module attributes {stable_mosaic.version = 11 : i64} {
  func.func @_sepconv_kernel(%arg0: i32, %arg1: i32, %arg2: memref<1x16x16x64xf32, #tpu.memory_space<vmem>>, %arg3: memref<9x64xf32, #tpu.memory_space<vmem>>, %arg4: memref<1x64xf32, #tpu.memory_space<vmem>>, %arg5: memref<64x128xbf16, #tpu.memory_space<vmem>>, %arg6: memref<1x128xf32, #tpu.memory_space<vmem>>, %arg7: memref<1x8x16x128xf32, #tpu.memory_space<vmem>>, %arg8: memref<1x18x18x64xf32, #tpu.memory_space<vmem>>) attributes {dimension_semantics = [#tpu.dimension_semantics<parallel>, #tpu.dimension_semantics<parallel>], iteration_bounds = array<i64: 1, 2>, scalar_prefetch = 0 : i64, scratch_operands = 1 : i64, tpu.core_type = #tpu.core_type<tc>, window_params = [{transform_indices = @transform_0, window_bounds = array<i64: 1, 16, 16, 64>}, {pipeline_mode = #tpu.pipeline_mode<synchronous>, transform_indices = @transform_1, window_bounds = array<i64: 9, 64>}, {pipeline_mode = #tpu.pipeline_mode<synchronous>, transform_indices = @transform_2, window_bounds = array<i64: 1, 64>}, {pipeline_mode = #tpu.pipeline_mode<synchronous>, transform_indices = @transform_3, window_bounds = array<i64: 64, 128>}, {pipeline_mode = #tpu.pipeline_mode<synchronous>, transform_indices = @transform_4, window_bounds = array<i64: 1, 128>}, {transform_indices = @transform_5, window_bounds = array<i64: 1, 8, 16, 128>}]} {
    %cst = arith.constant 0.000000e+00 : f32
    %0 = vector.broadcast %cst : f32 to vector<1x18x18x64xf32>
    %c0 = arith.constant 0 : index
    %c0_0 = arith.constant 0 : index
    %c0_1 = arith.constant 0 : index
    %c0_2 = arith.constant 0 : index
    %1 = vector.load %arg8[%c0, %c0_0, %c0_1, %c0_2] : memref<1x18x18x64xf32, #tpu.memory_space<vmem>>, vector<1x18x18x64xf32>
    tpu.vector_store %arg8[%c0, %c0_0, %c0_1, %c0_2], %0 {strides = array<i32>} : memref<1x18x18x64xf32, #tpu.memory_space<vmem>>, vector<1x18x18x64xf32>,
    %c0_3 = arith.constant 0 : index
    %c0_4 = arith.constant 0 : index
    %c0_5 = arith.constant 0 : index
    %c0_6 = arith.constant 0 : index
    %2 = vector.load %arg2[%c0_3, %c0_4, %c0_5, %c0_6] : memref<1x16x16x64xf32, #tpu.memory_space<vmem>>, vector<1x16x16x64xf32>
    %cst_7 = arith.constant 0.000000e+00 : f32
    %3 = vector.broadcast %cst_7 : f32 to vector<1x16x16x64xf32>
    %4 = arith.maximumf %2, %3 : vector<1x16x16x64xf32>
    %c0_8 = arith.constant 0 : index
    %c1 = arith.constant 1 : index
    %c1_9 = arith.constant 1 : index
    %c0_10 = arith.constant 0 : index
    %5 = vector.load %arg8[%c0_8, %c1, %c1_9, %c0_10] : memref<1x18x18x64xf32, #tpu.memory_space<vmem>>, vector<1x16x16x64xf32>
    tpu.vector_store %arg8[%c0_8, %c1, %c1_9, %c0_10], %4 {strides = array<i32>} : memref<1x18x18x64xf32, #tpu.memory_space<vmem>>, vector<1x16x16x64xf32>,
    %c8_i32 = arith.constant 8 : i32
    %6 = arith.muli %arg1, %c8_i32 : i32
    %c0_11 = arith.constant 0 : index
    %c0_12 = arith.constant 0 : index
    %7 = vector.load %arg4[%c0_11, %c0_12] : memref<1x64xf32, #tpu.memory_space<vmem>>, vector<1x64xf32>
    %8 = vector.shape_cast %7 : vector<1x64xf32> to vector<1x1x1x64xf32>
    %9 = vector.broadcast %8 : vector<1x1x1x64xf32> to vector<1x8x16x64xf32>
    %c0_i32 = arith.constant 0 : i32
    %10 = arith.addi %6, %c0_i32 : i32
    %c0_13 = arith.constant 0 : index
    %11 = arith.index_cast %10 : i32 to index
    %c0_14 = arith.constant 0 : index
    %c0_15 = arith.constant 0 : index
    %12 = vector.load %arg8[%c0_13, %11, %c0_14, %c0_15] : memref<1x18x18x64xf32, #tpu.memory_space<vmem>>, vector<1x8x16x64xf32>
    %c0_16 = arith.constant 0 : index
    %c0_17 = arith.constant 0 : index
    %13 = vector.load %arg3[%c0_16, %c0_17] : memref<9x64xf32, #tpu.memory_space<vmem>>, vector<1x64xf32>
    %14 = vector.shape_cast %13 : vector<1x64xf32> to vector<1x1x1x64xf32>
    %15 = vector.broadcast %14 : vector<1x1x1x64xf32> to vector<1x8x16x64xf32>
    %16 = arith.mulf %12, %15 : vector<1x8x16x64xf32>
    %17 = arith.addf %9, %16 : vector<1x8x16x64xf32>
    %c0_i32_18 = arith.constant 0 : i32
    %18 = arith.addi %6, %c0_i32_18 : i32
    %c0_19 = arith.constant 0 : index
    %19 = arith.index_cast %18 : i32 to index
    %c1_20 = arith.constant 1 : index
    %c0_21 = arith.constant 0 : index
    %20 = vector.load %arg8[%c0_19, %19, %c1_20, %c0_21] : memref<1x18x18x64xf32, #tpu.memory_space<vmem>>, vector<1x8x16x64xf32>
    %c1_22 = arith.constant 1 : index
    %c0_23 = arith.constant 0 : index
    %21 = vector.load %arg3[%c1_22, %c0_23] : memref<9x64xf32, #tpu.memory_space<vmem>>, vector<1x64xf32>
    %22 = vector.shape_cast %21 : vector<1x64xf32> to vector<1x1x1x64xf32>
    %23 = vector.broadcast %22 : vector<1x1x1x64xf32> to vector<1x8x16x64xf32>
    %24 = arith.mulf %20, %23 : vector<1x8x16x64xf32>
    %25 = arith.addf %17, %24 : vector<1x8x16x64xf32>
    %c0_i32_24 = arith.constant 0 : i32
    %26 = arith.addi %6, %c0_i32_24 : i32
    %c0_25 = arith.constant 0 : index
    %27 = arith.index_cast %26 : i32 to index
    %c2 = arith.constant 2 : index
    %c0_26 = arith.constant 0 : index
    %28 = vector.load %arg8[%c0_25, %27, %c2, %c0_26] : memref<1x18x18x64xf32, #tpu.memory_space<vmem>>, vector<1x8x16x64xf32>
    %c2_27 = arith.constant 2 : index
    %c0_28 = arith.constant 0 : index
    %29 = vector.load %arg3[%c2_27, %c0_28] : memref<9x64xf32, #tpu.memory_space<vmem>>, vector<1x64xf32>
    %30 = vector.shape_cast %29 : vector<1x64xf32> to vector<1x1x1x64xf32>
    %31 = vector.broadcast %30 : vector<1x1x1x64xf32> to vector<1x8x16x64xf32>
    %32 = arith.mulf %28, %31 : vector<1x8x16x64xf32>
    %33 = arith.addf %25, %32 : vector<1x8x16x64xf32>
    %c1_i32 = arith.constant 1 : i32
    %34 = arith.addi %6, %c1_i32 : i32
    %c0_29 = arith.constant 0 : index
    %35 = arith.index_cast %34 : i32 to index
    %c0_30 = arith.constant 0 : index
    %c0_31 = arith.constant 0 : index
    %36 = vector.load %arg8[%c0_29, %35, %c0_30, %c0_31] : memref<1x18x18x64xf32, #tpu.memory_space<vmem>>, vector<1x8x16x64xf32>
    %c3 = arith.constant 3 : index
    %c0_32 = arith.constant 0 : index
    %37 = vector.load %arg3[%c3, %c0_32] : memref<9x64xf32, #tpu.memory_space<vmem>>, vector<1x64xf32>
    %38 = vector.shape_cast %37 : vector<1x64xf32> to vector<1x1x1x64xf32>
    %39 = vector.broadcast %38 : vector<1x1x1x64xf32> to vector<1x8x16x64xf32>
    %40 = arith.mulf %36, %39 : vector<1x8x16x64xf32>
    %41 = arith.addf %33, %40 : vector<1x8x16x64xf32>
    %c1_i32_33 = arith.constant 1 : i32
    %42 = arith.addi %6, %c1_i32_33 : i32
    %c0_34 = arith.constant 0 : index
    %43 = arith.index_cast %42 : i32 to index
    %c1_35 = arith.constant 1 : index
    %c0_36 = arith.constant 0 : index
    %44 = vector.load %arg8[%c0_34, %43, %c1_35, %c0_36] : memref<1x18x18x64xf32, #tpu.memory_space<vmem>>, vector<1x8x16x64xf32>
    %c4 = arith.constant 4 : index
    %c0_37 = arith.constant 0 : index
    %45 = vector.load %arg3[%c4, %c0_37] : memref<9x64xf32, #tpu.memory_space<vmem>>, vector<1x64xf32>
    %46 = vector.shape_cast %45 : vector<1x64xf32> to vector<1x1x1x64xf32>
    %47 = vector.broadcast %46 : vector<1x1x1x64xf32> to vector<1x8x16x64xf32>
    %48 = arith.mulf %44, %47 : vector<1x8x16x64xf32>
    %49 = arith.addf %41, %48 : vector<1x8x16x64xf32>
    %c1_i32_38 = arith.constant 1 : i32
    %50 = arith.addi %6, %c1_i32_38 : i32
    %c0_39 = arith.constant 0 : index
    %51 = arith.index_cast %50 : i32 to index
    %c2_40 = arith.constant 2 : index
    %c0_41 = arith.constant 0 : index
    %52 = vector.load %arg8[%c0_39, %51, %c2_40, %c0_41] : memref<1x18x18x64xf32, #tpu.memory_space<vmem>>, vector<1x8x16x64xf32>
    %c5 = arith.constant 5 : index
    %c0_42 = arith.constant 0 : index
    %53 = vector.load %arg3[%c5, %c0_42] : memref<9x64xf32, #tpu.memory_space<vmem>>, vector<1x64xf32>
    %54 = vector.shape_cast %53 : vector<1x64xf32> to vector<1x1x1x64xf32>
    %55 = vector.broadcast %54 : vector<1x1x1x64xf32> to vector<1x8x16x64xf32>
    %56 = arith.mulf %52, %55 : vector<1x8x16x64xf32>
    %57 = arith.addf %49, %56 : vector<1x8x16x64xf32>
    %c2_i32 = arith.constant 2 : i32
    %58 = arith.addi %6, %c2_i32 : i32
    %c0_43 = arith.constant 0 : index
    %59 = arith.index_cast %58 : i32 to index
    %c0_44 = arith.constant 0 : index
    %c0_45 = arith.constant 0 : index
    %60 = vector.load %arg8[%c0_43, %59, %c0_44, %c0_45] : memref<1x18x18x64xf32, #tpu.memory_space<vmem>>, vector<1x8x16x64xf32>
    %c6 = arith.constant 6 : index
    %c0_46 = arith.constant 0 : index
    %61 = vector.load %arg3[%c6, %c0_46] : memref<9x64xf32, #tpu.memory_space<vmem>>, vector<1x64xf32>
    %62 = vector.shape_cast %61 : vector<1x64xf32> to vector<1x1x1x64xf32>
    %63 = vector.broadcast %62 : vector<1x1x1x64xf32> to vector<1x8x16x64xf32>
    %64 = arith.mulf %60, %63 : vector<1x8x16x64xf32>
    %65 = arith.addf %57, %64 : vector<1x8x16x64xf32>
    %c2_i32_47 = arith.constant 2 : i32
    %66 = arith.addi %6, %c2_i32_47 : i32
    %c0_48 = arith.constant 0 : index
    %67 = arith.index_cast %66 : i32 to index
    %c1_49 = arith.constant 1 : index
    %c0_50 = arith.constant 0 : index
    %68 = vector.load %arg8[%c0_48, %67, %c1_49, %c0_50] : memref<1x18x18x64xf32, #tpu.memory_space<vmem>>, vector<1x8x16x64xf32>
    %c7 = arith.constant 7 : index
    %c0_51 = arith.constant 0 : index
    %69 = vector.load %arg3[%c7, %c0_51] : memref<9x64xf32, #tpu.memory_space<vmem>>, vector<1x64xf32>
    %70 = vector.shape_cast %69 : vector<1x64xf32> to vector<1x1x1x64xf32>
    %71 = vector.broadcast %70 : vector<1x1x1x64xf32> to vector<1x8x16x64xf32>
    %72 = arith.mulf %68, %71 : vector<1x8x16x64xf32>
    %73 = arith.addf %65, %72 : vector<1x8x16x64xf32>
    %c2_i32_52 = arith.constant 2 : i32
    %74 = arith.addi %6, %c2_i32_52 : i32
    %c0_53 = arith.constant 0 : index
    %75 = arith.index_cast %74 : i32 to index
    %c2_54 = arith.constant 2 : index
    %c0_55 = arith.constant 0 : index
    %76 = vector.load %arg8[%c0_53, %75, %c2_54, %c0_55] : memref<1x18x18x64xf32, #tpu.memory_space<vmem>>, vector<1x8x16x64xf32>
    %c8 = arith.constant 8 : index
    %c0_56 = arith.constant 0 : index
    %77 = vector.load %arg3[%c8, %c0_56] : memref<9x64xf32, #tpu.memory_space<vmem>>, vector<1x64xf32>
    %78 = vector.shape_cast %77 : vector<1x64xf32> to vector<1x1x1x64xf32>
    %79 = vector.broadcast %78 : vector<1x1x1x64xf32> to vector<1x8x16x64xf32>
    %80 = arith.mulf %76, %79 : vector<1x8x16x64xf32>
    %81 = arith.addf %73, %80 : vector<1x8x16x64xf32>
    %82 = vector.shape_cast %81 : vector<1x8x16x64xf32> to vector<128x64xf32>
    %83 = arith.truncf %82 : vector<128x64xf32> to vector<128x64xbf16>
    %c0_57 = arith.constant 0 : index
    %c0_58 = arith.constant 0 : index
    %84 = vector.load %arg5[%c0_57, %c0_58] : memref<64x128xbf16, #tpu.memory_space<vmem>>, vector<64x128xbf16>
    %cst_59 = arith.constant dense<0.000000e+00> : vector<128x128xf32>
    %85 = tpu.matmul %83, %84, %cst_59 {dimension_numbers = #tpu.dot_dimension_numbers<[1], [0], [0], [1], [0, 0, 1, 1], [], []>} : vector<128x64xbf16>, vector<64x128xbf16>, vector<128x128xf32> -> vector<128x128xf32>
    %c0_60 = arith.constant 0 : index
    %c0_61 = arith.constant 0 : index
    %86 = vector.load %arg6[%c0_60, %c0_61] : memref<1x128xf32, #tpu.memory_space<vmem>>, vector<1x128xf32>
    %87 = vector.broadcast %86 : vector<1x128xf32> to vector<128x128xf32>
    %88 = arith.addf %85, %87 : vector<128x128xf32>
    %89 = vector.shape_cast %88 : vector<128x128xf32> to vector<1x8x16x128xf32>
    %c0_62 = arith.constant 0 : index
    %c0_63 = arith.constant 0 : index
    %c0_64 = arith.constant 0 : index
    %c0_65 = arith.constant 0 : index
    %90 = vector.load %arg7[%c0_62, %c0_63, %c0_64, %c0_65] : memref<1x8x16x128xf32, #tpu.memory_space<vmem>>, vector<1x8x16x128xf32>
    tpu.vector_store %arg7[%c0_62, %c0_63, %c0_64, %c0_65], %89 {strides = array<i32>} : memref<1x8x16x128xf32, #tpu.memory_space<vmem>>, vector<1x8x16x128xf32>,
    return
  }
  func.func @transform_0(%arg0: i32, %arg1: i32) -> (i32, i32, i32, i32) {
    %c0_i32 = arith.constant 0 : i32
    %c0_i32_0 = arith.constant 0 : i32
    %c0_i32_1 = arith.constant 0 : i32
    %c0_i32_2 = arith.constant 0 : i32
    return %arg0, %c0_i32, %c0_i32_0, %c0_i32_1 : i32, i32, i32, i32
  }
  func.func @transform_1(%arg0: i32, %arg1: i32) -> (i32, i32) {
    %c0_i32 = arith.constant 0 : i32
    %c0_i32_0 = arith.constant 0 : i32
    %c0_i32_1 = arith.constant 0 : i32
    return %c0_i32, %c0_i32_0 : i32, i32
  }
  func.func @transform_2(%arg0: i32, %arg1: i32) -> (i32, i32) {
    %c0_i32 = arith.constant 0 : i32
    %c0_i32_0 = arith.constant 0 : i32
    %c0_i32_1 = arith.constant 0 : i32
    return %c0_i32, %c0_i32_0 : i32, i32
  }
  func.func @transform_3(%arg0: i32, %arg1: i32) -> (i32, i32) {
    %c0_i32 = arith.constant 0 : i32
    %c0_i32_0 = arith.constant 0 : i32
    %c0_i32_1 = arith.constant 0 : i32
    return %c0_i32, %c0_i32_0 : i32, i32
  }
  func.func @transform_4(%arg0: i32, %arg1: i32) -> (i32, i32) {
    %c0_i32 = arith.constant 0 : i32
    %c0_i32_0 = arith.constant 0 : i32
    %c0_i32_1 = arith.constant 0 : i32
    return %c0_i32, %c0_i32_0 : i32, i32
  }
  func.func @transform_5(%arg0: i32, %arg1: i32) -> (i32, i32, i32, i32) {
    %c0_i32 = arith.constant 0 : i32
    %c0_i32_0 = arith.constant 0 : i32
    %c0_i32_1 = arith.constant 0 : i32
    return %arg0, %arg1, %c0_i32, %c0_i32_0 : i32, i32, i32, i32
  }
}

</mosaic_0001>

<llo_original>
// kernel: tpu_custom_call.1
$region0: #{tpu_custom_call.1}
  #allocation0 [shape = 'u32[]', space=smem, size = 0x4, offset = 0x4, fixed_abs, tag = 'smem constant byte address 0x4 - core index']
  #allocation1 [shape = 'u32[144,128]{1,0:T(1,128)}', space=vmem, size = 0x12000, scoped, tag = 'internal scratch']
  #allocation2 [shape = 'f32[1,18,18,64]{3,2,1,0:T(8,128)}', space=vmem, size = 0x36000, scoped, tag = 'scratch operand']
  %s0 = inlined_call_operand.hbm [shape: f32[1,16,16,64], index: 0, kind: input, shape index: {}]
  %s1 = inlined_call_operand.hbm [shape: f32[9,64], index: 1, kind: input, shape index: {}]
  %s2 = inlined_call_operand.vmem [shape: f32[1,64], index: 2, kind: input, shape index: {}]
  %s3 = inlined_call_operand.hbm [shape: bf16[64,128], index: 3, kind: input, shape index: {}]
  %s4 = inlined_call_operand.vmem [shape: f32[1,128], index: 4, kind: input, shape index: {}]
  %s5 = inlined_call_operand.hbm [shape: f32[1,16,16,128], index: 5, kind: output, shape index: {}]
  %s6 = sld [smem:[#allocation0]]
  $region65: #{tpu_custom_call.1} parent=0
    _
  %s8 = ssub.s32 1, %s6
  %s9 = scalar_select 0, %s8, %s6
  $region1: #{tpu_custom_call.1} parent=0
    #allocation3 [shape = 'u8[131072]{0}', space=vmem, size = 0x20000, scoped, tag = 'input window, operand 0, single buffered']
    #allocation4 [shape = 's32[2]{0}', space=sflag, size = 0x8, scoped, tag = 'scoped memory for tpu_custom_call.1']
    #allocation5 [shape = 's32[2]{0}', space=sflag, size = 0x8, scoped, tag = 'scoped memory for tpu_custom_call.1']
    #allocation6 [shape = 'u8[8192]{0}', space=vmem, size = 0x2000, scoped, tag = 'input window, operand 1, single buffered']
    #allocation7 [shape = 's32[1]{0}', space=sflag, size = 0x4, scoped, tag = 'scoped memory for tpu_custom_call.1']
    #allocation8 [shape = 'u8[16384]{0}', space=vmem, size = 0x4000, scoped, tag = 'input window, operand 3, single buffered']
    #allocation9 [shape = 'u8[131072]{0}', space=vmem, size = 0x20000, scoped, tag = 'output window, operand 0']
    %10 = vsyncpa [#allocation4], 0
    %11 = vsyncpa [#allocation7], 0
    %12 = vsyncpa [#allocation5], 0
    %s13 = scalar_lea.sflag [#allocation5], 1
    %14 = vsyncpa %s13, 0
    loop: start=0, step=1, limit=4
    $region2: #{tpu_custom_call.1} parent=1 // loop_pre_header
      _
    $region3: #{tpu_custom_call.1} parent=1 // loop_header
      %s16 = sphi 0, %s20
      %p17 = scmp.ge.s32.totalorder %s16, 4
      %s23 = sphi 0, %s35
      %s24 = sphi 0, %s31
      %s25 = sphi 0, %s23
      %s26 = sphi 0, %s24
      %s27 = sphi 0, %s25
      %s28 = sphi 0, %s26
      %s38 = sphi 0, %s40
      %s41 = sphi 0, %s38
      %s42 = sphi 0, %s41
      %s58 = sphi 0, %s42
      %s62 = sphi 0, %s62
      %s64 = sphi 0, %s62
      %s65 = sphi 0, %s64
      %s79 = sphi 0, %s65
      %s83 = sphi 0, %s83
      %s85 = sphi 0, %s83
      %s86 = sphi 0, %s85
      %s100 = sphi 0, %s86
      %s104 = sphi 0, %s104
      %s106 = sphi 0, %s104
      %s107 = sphi 0, %s106
      %s121 = sphi 0, %s107
      %s125 = sphi 0, %s125
      %s127 = sphi 0, %s125
      %s128 = sphi 0, %s127
      %s142 = sphi 0, %s128
      %s150 = sphi 0, %s152
      %s153 = sphi 0, %s150
      %s154 = sphi 0, %s153
      %s170 = sphi 0, %s154
    $region4: #{tpu_custom_call.1} parent=1 // loop_header_branch
      %19 = sbr.rel (%p17) target = $region8
    $region5: #{tpu_custom_call.1} parent=1 // loop_body
      %s21 = ssub.s32 %s16, 1
      %s22 = ssub.s32 %s16, 2
      %s29 = sadd.s32 1, %s24
      %p30 = scmp.ge.s32.totalorder %s29, 2
      %s31 = scalar_select %p30, 0, %s29
      %s32 = sadd.s32 1, %s23
      %s33 = scalar_select %p30, %s32, %s23
      %p34 = scmp.ge.s32.totalorder %s33, 1
      %s35 = scalar_select %p34, 0, %s33
      %s36 = ssub.s32 %s23, %s35
      %p37 = scmp.eq.s32.totalorder %s36, 0
      %s39 = sadd.s32 %s38, 1
      %s40 = scalar_select %p37, %s38, %s39
      %p43 = pneg %p37
      %p44 = scmp.eq.s32.totalorder %s16, 1
      %p45 = por %p43, %p44
      %p46 = scmp.ne.s32.totalorder %s38, %s41
      %p47 = scmp.eq.s32.totalorder %s16, 0
      %p48 = por %p46, %p47
      %p49 = scmp.ne.s32.totalorder %s38, %s41
      %p50 = scmp.eq.s32.totalorder %s21, 1
      %p51 = por %p49, %p50
      %p52 = scmp.ne.s32.totalorder %s41, %s42
      %p53 = scmp.eq.s32.totalorder %s21, 0
      %p54 = por %p52, %p53
      %p55 = scmp.ne.s32.totalorder %s41, %s42
      %p56 = scmp.eq.s32.totalorder %s22, 1
      %p57 = por %p55, %p56
      %p59 = scmp.ne.s32.totalorder %s42, %s58
      %p60 = scmp.eq.s32.totalorder %s22, 0
      %p61 = por %p59, %p60
      %s63 = sadd.s32 %s62, 1
      %p66 = scmp.eq.s32.totalorder %s16, 1
      %p67 = scmp.ne.s32.totalorder %s62, %s64
      %p68 = scmp.eq.s32.totalorder %s16, 0
      %p69 = por %p67, %p68
      %p70 = scmp.ne.s32.totalorder %s62, %s64
      %p71 = scmp.eq.s32.totalorder %s21, 1
      %p72 = por %p70, %p71
      %p73 = scmp.ne.s32.totalorder %s64, %s65
      %p74 = scmp.eq.s32.totalorder %s21, 0
      %p75 = por %p73, %p74
      %p76 = scmp.ne.s32.totalorder %s64, %s65
      %p77 = scmp.eq.s32.totalorder %s22, 1
      %p78 = por %p76, %p77
      %p80 = scmp.ne.s32.totalorder %s65, %s79
      %p81 = scmp.eq.s32.totalorder %s22, 0
      %p82 = por %p80, %p81
      %s84 = sadd.s32 %s83, 1
      %p87 = scmp.eq.s32.totalorder %s16, 1
      %p88 = scmp.ne.s32.totalorder %s83, %s85
      %p89 = scmp.eq.s32.totalorder %s16, 0
      %p90 = por %p88, %p89
      %p91 = scmp.ne.s32.totalorder %s83, %s85
      %p92 = scmp.eq.s32.totalorder %s21, 1
      %p93 = por %p91, %p92
      %p94 = scmp.ne.s32.totalorder %s85, %s86
      %p95 = scmp.eq.s32.totalorder %s21, 0
      %p96 = por %p94, %p95
      %p97 = scmp.ne.s32.totalorder %s85, %s86
      %p98 = scmp.eq.s32.totalorder %s22, 1
      %p99 = por %p97, %p98
      %p101 = scmp.ne.s32.totalorder %s86, %s100
      %p102 = scmp.eq.s32.totalorder %s22, 0
      %p103 = por %p101, %p102
      %s105 = sadd.s32 %s104, 1
      %p108 = scmp.eq.s32.totalorder %s16, 1
      %p109 = scmp.ne.s32.totalorder %s104, %s106
      %p110 = scmp.eq.s32.totalorder %s16, 0
      %p111 = por %p109, %p110
      %p112 = scmp.ne.s32.totalorder %s104, %s106
      %p113 = scmp.eq.s32.totalorder %s21, 1
      %p114 = por %p112, %p113
      %p115 = scmp.ne.s32.totalorder %s106, %s107
      %p116 = scmp.eq.s32.totalorder %s21, 0
      %p117 = por %p115, %p116
      %p118 = scmp.ne.s32.totalorder %s106, %s107
      %p119 = scmp.eq.s32.totalorder %s22, 1
      %p120 = por %p118, %p119
      %p122 = scmp.ne.s32.totalorder %s107, %s121
      %p123 = scmp.eq.s32.totalorder %s22, 0
      %p124 = por %p122, %p123
      %s126 = sadd.s32 %s125, 1
      %p129 = scmp.eq.s32.totalorder %s16, 1
      %p130 = scmp.ne.s32.totalorder %s125, %s127
      %p131 = scmp.eq.s32.totalorder %s16, 0
      %p132 = por %p130, %p131
      %p133 = scmp.ne.s32.totalorder %s125, %s127
      %p134 = scmp.eq.s32.totalorder %s21, 1
      %p135 = por %p133, %p134
      %p136 = scmp.ne.s32.totalorder %s127, %s128
      %p137 = scmp.eq.s32.totalorder %s21, 0
      %p138 = por %p136, %p137
      %p139 = scmp.ne.s32.totalorder %s127, %s128
      %p140 = scmp.eq.s32.totalorder %s22, 1
      %p141 = por %p139, %p140
      %p143 = scmp.ne.s32.totalorder %s128, %s142
      %p144 = scmp.eq.s32.totalorder %s22, 0
      %p145 = por %p143, %p144
      %s146 = ssub.s32 %s23, %s35
      %s147 = ssub.s32 %s24, %s31
      %s148 = sor.u32 %s146, %s147
      %p149 = scmp.eq.s32.totalorder %s148, 0
      %s151 = sadd.s32 %s150, 1
      %s152 = scalar_select %p149, %s150, %s151
      %p155 = pneg %p149
      %p156 = scmp.eq.s32.totalorder %s16, 1
      %p157 = por %p155, %p156
      %p158 = scmp.ne.s32.totalorder %s150, %s153
      %p159 = scmp.eq.s32.totalorder %s16, 0
      %p160 = por %p158, %p159
      %p161 = scmp.ne.s32.totalorder %s150, %s153
      %p162 = scmp.eq.s32.totalorder %s21, 1
      %p163 = por %p161, %p162
      %p164 = scmp.ne.s32.totalorder %s153, %s154
      %p165 = scmp.eq.s32.totalorder %s21, 0
      %p166 = por %p164, %p165
      %p167 = scmp.ne.s32.totalorder %s153, %s154
      %p168 = scmp.eq.s32.totalorder %s22, 1
      %p169 = por %p167, %p168
      %p171 = scmp.ne.s32.totalorder %s154, %s170
      %p172 = scmp.eq.s32.totalorder %s22, 0
      %p173 = por %p171, %p172
      %p174 = scmp.le.s32.totalorder 1, %s16
      %p175 = scmp.lt.s32.totalorder %s16, 3
      %p176 = pnand %p174, %p175
      %p177 = pneg %p176
      // Predicated region
      $region9: #{tpu_custom_call.1} parent=5 // pred_check
        _
      $region10: #{tpu_custom_call.1} parent=5 // pred_check_branch
        %179 = sbr.rel (%p176) target = $region12
      $region11: #{tpu_custom_call.1} parent=5 // pred_region
        %s180 = ssub.s32 %s16, 1
        // Predicated region
        $region13: #{tpu_custom_call.1} parent=11 // pred_check
          %p181 = pneg %p54
        $region14: #{tpu_custom_call.1} parent=11 // pred_check_branch
          %183 = sbr.rel (%p181) target = $region16
        $region15: #{tpu_custom_call.1} parent=11 // pred_region
          %s185 = ssub.s32 4096, 4096
          %186 = vsyncadd [#allocation4], %s185
          %s187 = smul.addr %s25, 32
          %s188 = smul.addr %s187, 128
          %s189 = scalar_lea.hbm %s0, %s188
          %s190 = sshll.u32 [#allocation3], 4
          %s191 = int_to_ptr.vmem [resolvable:$true] %s190
          %196 = dma.hbm_to_vmem [thread:$0]  %s189, 4096, %s191, [#allocation4], 128, 128, 8
        $region16: #{tpu_custom_call.1} parent=11 // pred_fallthru
          _
        // Predicated region
        $region17: #{tpu_custom_call.1} parent=11 // pred_check
          %p197 = pneg %p75
        $region18: #{tpu_custom_call.1} parent=11 // pred_check_branch
          %199 = sbr.rel (%p197) target = $region20
        $region19: #{tpu_custom_call.1} parent=11 // pred_region
          %s201 = ssub.s32 256, 256
          %202 = vsyncadd [#allocation7], %s201
          %s203 = sshll.u32 [#allocation6], 4
          %s204 = int_to_ptr.vmem [resolvable:$true] %s203
          %209 = dma.hbm_to_vmem [thread:$0]  %s1, 256, %s204, [#allocation7], 128, 128, 8
        $region20: #{tpu_custom_call.1} parent=11 // pred_fallthru
          _
        // Predicated region
        $region21: #{tpu_custom_call.1} parent=11 // pred_check
          %p210 = pneg %p96
        $region22: #{tpu_custom_call.1} parent=11 // pred_check_branch
          %212 = sbr.rel (%p210) target = $region24
        $region23: #{tpu_custom_call.1} parent=11 // pred_region
          _
        $region24: #{tpu_custom_call.1} parent=11 // pred_fallthru
          _
        // Predicated region
        $region25: #{tpu_custom_call.1} parent=11 // pred_check
          %p213 = pneg %p117
        $region26: #{tpu_custom_call.1} parent=11 // pred_check_branch
          %215 = sbr.rel (%p213) target = $region28
        $region27: #{tpu_custom_call.1} parent=11 // pred_region
          %s217 = ssub.s32 512, 512
          %218 = vsyncadd [#allocation7], %s217
          %s219 = sshll.u32 [#allocation8], 4
          %s220 = int_to_ptr.vmem [resolvable:$true] %s219
          %225 = dma.hbm_to_vmem [thread:$0]  %s3, 512, %s220, [#allocation7], 64, 64, 4
        $region28: #{tpu_custom_call.1} parent=11 // pred_fallthru
          _
        // Predicated region
        $region29: #{tpu_custom_call.1} parent=11 // pred_check
          %p226 = pneg %p138
        $region30: #{tpu_custom_call.1} parent=11 // pred_check_branch
          %228 = sbr.rel (%p226) target = $region32
        $region31: #{tpu_custom_call.1} parent=11 // pred_region
          _
        $region32: #{tpu_custom_call.1} parent=11 // pred_fallthru
          _
      $region12: #{tpu_custom_call.1} parent=5 // pred_fallthru
        _
      %p229 = scmp.lt.s32.totalorder %s16, 2
      // Predicated region
      $region33: #{tpu_custom_call.1} parent=5 // pred_check
        %p230 = pneg %p229
      $region34: #{tpu_custom_call.1} parent=5 // pred_check_branch
        %232 = sbr.rel (%p230) target = $region36
      $region35: #{tpu_custom_call.1} parent=5 // pred_region
        _
      $region36: #{tpu_custom_call.1} parent=5 // pred_fallthru
        _
      %p233 = scmp.le.s32.totalorder 1, %s16
      %p234 = scmp.lt.s32.totalorder %s16, 3
      %p235 = pnand %p233, %p234
      %p236 = pneg %p235
      // Predicated region
      $region37: #{tpu_custom_call.1} parent=5 // pred_check
        _
      $region38: #{tpu_custom_call.1} parent=5 // pred_check_branch
        %238 = sbr.rel (%p235) target = $region40
      $region39: #{tpu_custom_call.1} parent=5 // pred_region
        %s239 = ssub.s32 %s16, 1
        // Predicated region
        $region41: #{tpu_custom_call.1} parent=39 // pred_check
          %p240 = pneg %p54
        $region42: #{tpu_custom_call.1} parent=39 // pred_check_branch
          %242 = sbr.rel (%p240) target = $region44
        $region43: #{tpu_custom_call.1} parent=39 // pred_region
          %243 = dma.done [#allocation4], 4096
        $region44: #{tpu_custom_call.1} parent=39 // pred_fallthru
          _
        // Predicated region
        $region45: #{tpu_custom_call.1} parent=39 // pred_check
          %p244 = pneg %p75
        $region46: #{tpu_custom_call.1} parent=39 // pred_check_branch
          %246 = sbr.rel (%p244) target = $region48
        $region47: #{tpu_custom_call.1} parent=39 // pred_region
          %247 = dma.done [#allocation7], 256
        $region48: #{tpu_custom_call.1} parent=39 // pred_fallthru
          _
        // Predicated region
        $region49: #{tpu_custom_call.1} parent=39 // pred_check
          %p248 = pneg %p117
        $region50: #{tpu_custom_call.1} parent=39 // pred_check_branch
          %250 = sbr.rel (%p248) target = $region52
        $region51: #{tpu_custom_call.1} parent=39 // pred_region
          %251 = dma.done [#allocation7], 512
        $region52: #{tpu_custom_call.1} parent=39 // pred_fallthru
          _
        %p252 = pneg %p54
        %p253 = pneg %p51
        %p254 = pneg %p75
        %p255 = pneg %p72
        %p256 = pneg %p96
        %p257 = pneg %p93
        %p258 = pneg %p117
        %p259 = pneg %p114
        %p260 = pneg %p138
        %p261 = pneg %p135
        %p262 = pneg %p166
        %p263 = pneg %p163
        %s264 = sand.u32 %s153, 1
        %s265 = scalar_lea.sflag [#allocation5], %s264
        %s266 = sand.u32 %s153, 1
        %s267 = smul.addr %s266, 128
        %s268 = scalar_lea.vmem [#allocation9], %s267
        %s269 = smul.u32 8, %s26
        %vm271 = vcmask 523264
        %272 = vst.msk [vmem:[#allocation2] sm:$0xff] %vm271, 0.0
        %273 = vst.msk [vmem:[#allocation2 + $0x8] sm:$0xff] %vm271, 0.0
        %vm274 = vcmask 517120
        %275 = vst.msk [vmem:[#allocation2 + $0x10] sm:$0x3] %vm274, 0.0
        %276 = vst.msk [vmem:[#allocation2 + $0x18] sm:$0xff] %vm271, 0.0
        %277 = vst.msk [vmem:[#allocation2 + $0x20] sm:$0xff] %vm271, 0.0
        %278 = vst.msk [vmem:[#allocation2 + $0x28] sm:$0x3] %vm274, 0.0
        %279 = vst.msk [vmem:[#allocation2 + $0x30] sm:$0xff] %vm271, 0.0
        %280 = vst.msk [vmem:[#allocation2 + $0x38] sm:$0xff] %vm271, 0.0
        %281 = vst.msk [vmem:[#allocation2 + $0x40] sm:$0x3] %vm274, 0.0
        %282 = vst.msk [vmem:[#allocation2 + $0x48] sm:$0xff] %vm271, 0.0
        %283 = vst.msk [vmem:[#allocation2 + $0x50] sm:$0xff] %vm271, 0.0
        %284 = vst.msk [vmem:[#allocation2 + $0x58] sm:$0x3] %vm274, 0.0
        %285 = vst.msk [vmem:[#allocation2 + $0x60] sm:$0xff] %vm271, 0.0
        %286 = vst.msk [vmem:[#allocation2 + $0x68] sm:$0xff] %vm271, 0.0
        %287 = vst.msk [vmem:[#allocation2 + $0x70] sm:$0x3] %vm274, 0.0
        %288 = vst.msk [vmem:[#allocation2 + $0x78] sm:$0xff] %vm271, 0.0
        %289 = vst.msk [vmem:[#allocation2 + $0x80] sm:$0xff] %vm271, 0.0
        %290 = vst.msk [vmem:[#allocation2 + $0x88] sm:$0x3] %vm274, 0.0
        %291 = vst.msk [vmem:[#allocation2 + $0x90] sm:$0xff] %vm271, 0.0
        %292 = vst.msk [vmem:[#allocation2 + $0x98] sm:$0xff] %vm271, 0.0
        %293 = vst.msk [vmem:[#allocation2 + $0xa0] sm:$0x3] %vm274, 0.0
        %294 = vst.msk [vmem:[#allocation2 + $0xa8] sm:$0xff] %vm271, 0.0
        %295 = vst.msk [vmem:[#allocation2 + $0xb0] sm:$0xff] %vm271, 0.0
        %296 = vst.msk [vmem:[#allocation2 + $0xb8] sm:$0x3] %vm274, 0.0
        %297 = vst.msk [vmem:[#allocation2 + $0xc0] sm:$0xff] %vm271, 0.0
        %298 = vst.msk [vmem:[#allocation2 + $0xc8] sm:$0xff] %vm271, 0.0
        %299 = vst.msk [vmem:[#allocation2 + $0xd0] sm:$0x3] %vm274, 0.0
        %300 = vst.msk [vmem:[#allocation2 + $0xd8] sm:$0xff] %vm271, 0.0
        %301 = vst.msk [vmem:[#allocation2 + $0xe0] sm:$0xff] %vm271, 0.0
        %302 = vst.msk [vmem:[#allocation2 + $0xe8] sm:$0x3] %vm274, 0.0
        %303 = vst.msk [vmem:[#allocation2 + $0xf0] sm:$0xff] %vm271, 0.0
        %304 = vst.msk [vmem:[#allocation2 + $0xf8] sm:$0xff] %vm271, 0.0
        %305 = vst.msk [vmem:[#allocation2 + $0x100] sm:$0x3] %vm274, 0.0
        %306 = vst.msk [vmem:[#allocation2 + $0x108] sm:$0xff] %vm271, 0.0
        %307 = vst.msk [vmem:[#allocation2 + $0x110] sm:$0xff] %vm271, 0.0
        %308 = vst.msk [vmem:[#allocation2 + $0x118] sm:$0x3] %vm274, 0.0
        %309 = vst.msk [vmem:[#allocation2 + $0x120] sm:$0xff] %vm271, 0.0
        %310 = vst.msk [vmem:[#allocation2 + $0x128] sm:$0xff] %vm271, 0.0
        %311 = vst.msk [vmem:[#allocation2 + $0x130] sm:$0x3] %vm274, 0.0
        %312 = vst.msk [vmem:[#allocation2 + $0x138] sm:$0xff] %vm271, 0.0
        %313 = vst.msk [vmem:[#allocation2 + $0x140] sm:$0xff] %vm271, 0.0
        %314 = vst.msk [vmem:[#allocation2 + $0x148] sm:$0x3] %vm274, 0.0
        %315 = vst.msk [vmem:[#allocation2 + $0x150] sm:$0xff] %vm271, 0.0
        %316 = vst.msk [vmem:[#allocation2 + $0x158] sm:$0xff] %vm271, 0.0
        %317 = vst.msk [vmem:[#allocation2 + $0x160] sm:$0x3] %vm274, 0.0
        %318 = vst.msk [vmem:[#allocation2 + $0x168] sm:$0xff] %vm271, 0.0
        %319 = vst.msk [vmem:[#allocation2 + $0x170] sm:$0xff] %vm271, 0.0
        %320 = vst.msk [vmem:[#allocation2 + $0x178] sm:$0x3] %vm274, 0.0
        %321 = vst.msk [vmem:[#allocation2 + $0x180] sm:$0xff] %vm271, 0.0
        %322 = vst.msk [vmem:[#allocation2 + $0x188] sm:$0xff] %vm271, 0.0
        %323 = vst.msk [vmem:[#allocation2 + $0x190] sm:$0x3] %vm274, 0.0
        %324 = vst.msk [vmem:[#allocation2 + $0x198] sm:$0xff] %vm271, 0.0
        %325 = vst.msk [vmem:[#allocation2 + $0x1a0] sm:$0xff] %vm271, 0.0
        %326 = vst.msk [vmem:[#allocation2 + $0x1a8] sm:$0x3] %vm274, 0.0
        %v327 = vld [vmem:[#allocation3] sm:$0xff]
        %v328 = vld [vmem:[#allocation3 + $0x8] sm:$0xff]
        %v329 = vld [vmem:[#allocation3 + $0x10] sm:$0xff]
        %v330 = vld [vmem:[#allocation3 + $0x18] sm:$0xff]
        %v331 = vld [vmem:[#allocation3 + $0x20] sm:$0xff]
        %v332 = vld [vmem:[#allocation3 + $0x28] sm:$0xff]
        %v333 = vld [vmem:[#allocation3 + $0x30] sm:$0xff]
        %v334 = vld [vmem:[#allocation3 + $0x38] sm:$0xff]
        %v335 = vld [vmem:[#allocation3 + $0x40] sm:$0xff]
        %v336 = vld [vmem:[#allocation3 + $0x48] sm:$0xff]
        %v337 = vld [vmem:[#allocation3 + $0x50] sm:$0xff]
        %v338 = vld [vmem:[#allocation3 + $0x58] sm:$0xff]
        %v339 = vld [vmem:[#allocation3 + $0x60] sm:$0xff]
        %v340 = vld [vmem:[#allocation3 + $0x68] sm:$0xff]
        %v341 = vld [vmem:[#allocation3 + $0x70] sm:$0xff]
        %v342 = vld [vmem:[#allocation3 + $0x78] sm:$0xff]
        %v343 = vld [vmem:[#allocation3 + $0x80] sm:$0xff]
        %v344 = vld [vmem:[#allocation3 + $0x88] sm:$0xff]
        %v345 = vld [vmem:[#allocation3 + $0x90] sm:$0xff]
        %v346 = vld [vmem:[#allocation3 + $0x98] sm:$0xff]
        %v347 = vld [vmem:[#allocation3 + $0xa0] sm:$0xff]
        %v348 = vld [vmem:[#allocation3 + $0xa8] sm:$0xff]
        %v349 = vld [vmem:[#allocation3 + $0xb0] sm:$0xff]
        %v350 = vld [vmem:[#allocation3 + $0xb8] sm:$0xff]
        %v351 = vld [vmem:[#allocation3 + $0xc0] sm:$0xff]
        %v352 = vld [vmem:[#allocation3 + $0xc8] sm:$0xff]
        %v353 = vld [vmem:[#allocation3 + $0xd0] sm:$0xff]
        %v354 = vld [vmem:[#allocation3 + $0xd8] sm:$0xff]
        %v355 = vld [vmem:[#allocation3 + $0xe0] sm:$0xff]
        %v356 = vld [vmem:[#allocation3 + $0xe8] sm:$0xff]
        %v357 = vld [vmem:[#allocation3 + $0xf0] sm:$0xff]
        %v358 = vld [vmem:[#allocation3 + $0xf8] sm:$0xff]
        %v359 = vmax.f32 %v327, 0.0
        %v360 = vmax.f32 %v328, 0.0
        %v361 = vmax.f32 %v329, 0.0
        %v362 = vmax.f32 %v330, 0.0
        %v363 = vmax.f32 %v331, 0.0
        %v364 = vmax.f32 %v332, 0.0
        %v365 = vmax.f32 %v333, 0.0
        %v366 = vmax.f32 %v334, 0.0
        %v367 = vmax.f32 %v335, 0.0
        %v368 = vmax.f32 %v336, 0.0
        %v369 = vmax.f32 %v337, 0.0
        %v370 = vmax.f32 %v338, 0.0
        %v371 = vmax.f32 %v339, 0.0
        %v372 = vmax.f32 %v340, 0.0
        %v373 = vmax.f32 %v341, 0.0
        %v374 = vmax.f32 %v342, 0.0
        %v375 = vmax.f32 %v343, 0.0
        %v376 = vmax.f32 %v344, 0.0
        %v377 = vmax.f32 %v345, 0.0
        %v378 = vmax.f32 %v346, 0.0
        %v379 = vmax.f32 %v347, 0.0
        %v380 = vmax.f32 %v348, 0.0
        %v381 = vmax.f32 %v349, 0.0
        %v382 = vmax.f32 %v350, 0.0
        %v383 = vmax.f32 %v351, 0.0
        %v384 = vmax.f32 %v352, 0.0
        %v385 = vmax.f32 %v353, 0.0
        %v386 = vmax.f32 %v354, 0.0
        %v387 = vmax.f32 %v355, 0.0
        %v388 = vmax.f32 %v356, 0.0
        %v389 = vmax.f32 %v357, 0.0
        %v390 = vmax.f32 %v358, 0.0
        %s391 = scalar_lea.vmem [#allocation2], 24
        %392 = vst.msk [vmem:[%s391 + $0x1] sm:$0xff] %vm271, %v359
        %393 = vst.msk [vmem:[%s391 + $0x9] sm:$0xff] %vm271, %v360
        %394 = vst.msk [vmem:[%s391 + $0x19] sm:$0xff] %vm271, %v361
        %395 = vst.msk [vmem:[%s391 + $0x21] sm:$0xff] %vm271, %v362
        %396 = vst.msk [vmem:[%s391 + $0x31] sm:$0xff] %vm271, %v363
        %397 = vst.msk [vmem:[%s391 + $0x39] sm:$0xff] %vm271, %v364
        %398 = vst.msk [vmem:[%s391 + $0x49] sm:$0xff] %vm271, %v365
        %399 = vst.msk [vmem:[%s391 + $0x51] sm:$0xff] %vm271, %v366
        %400 = vst.msk [vmem:[%s391 + $0x61] sm:$0xff] %vm271, %v367
        %401 = vst.msk [vmem:[%s391 + $0x69] sm:$0xff] %vm271, %v368
        %402 = vst.msk [vmem:[%s391 + $0x79] sm:$0xff] %vm271, %v369
        %403 = vst.msk [vmem:[%s391 + $0x81] sm:$0xff] %vm271, %v370
        %404 = vst.msk [vmem:[%s391 + $0x91] sm:$0xff] %vm271, %v371
        %405 = vst.msk [vmem:[%s391 + $0x99] sm:$0xff] %vm271, %v372
        %406 = vst.msk [vmem:[%s391 + $0xa9] sm:$0xff] %vm271, %v373
        %407 = vst.msk [vmem:[%s391 + $0xb1] sm:$0xff] %vm271, %v374
        %408 = vst.msk [vmem:[%s391 + $0xc1] sm:$0xff] %vm271, %v375
        %409 = vst.msk [vmem:[%s391 + $0xc9] sm:$0xff] %vm271, %v376
        %410 = vst.msk [vmem:[%s391 + $0xd9] sm:$0xff] %vm271, %v377
        %411 = vst.msk [vmem:[%s391 + $0xe1] sm:$0xff] %vm271, %v378
        %412 = vst.msk [vmem:[%s391 + $0xf1] sm:$0xff] %vm271, %v379
        %413 = vst.msk [vmem:[%s391 + $0xf9] sm:$0xff] %vm271, %v380
        %414 = vst.msk [vmem:[%s391 + $0x109] sm:$0xff] %vm271, %v381
        %415 = vst.msk [vmem:[%s391 + $0x111] sm:$0xff] %vm271, %v382
        %416 = vst.msk [vmem:[%s391 + $0x121] sm:$0xff] %vm271, %v383
        %417 = vst.msk [vmem:[%s391 + $0x129] sm:$0xff] %vm271, %v384
        %418 = vst.msk [vmem:[%s391 + $0x139] sm:$0xff] %vm271, %v385
        %419 = vst.msk [vmem:[%s391 + $0x141] sm:$0xff] %vm271, %v386
        %420 = vst.msk [vmem:[%s391 + $0x151] sm:$0xff] %vm271, %v387
        %421 = vst.msk [vmem:[%s391 + $0x159] sm:$0xff] %vm271, %v388
        %422 = vst.msk [vmem:[%s391 + $0x169] sm:$0xff] %vm271, %v389
        %423 = vst.msk [vmem:[%s391 + $0x171] sm:$0xff] %vm271, %v390
        %s424 = smul.u32 %s26, 8
        %v425 = vld [vmem:[%s2] sm:$0x1]
        %v427 = vlaneseq
        %v428 = vshrl.u32 %v427, 7
        %v429 = vsub.s32 0, %v428
        %v430 = vrot.slane %v425, %v429
        %s432 = smul.u32 %s424, 24
        %s433 = scalar_lea.vmem [#allocation2], %s432
        %v434 = vld [vmem:[%s433] sm:$0xff]
        %v435 = vld [vmem:[%s433 + $0x8] sm:$0xff]
        %v436 = vld [vmem:[%s433 + $0x18] sm:$0xff]
        %v437 = vld [vmem:[%s433 + $0x20] sm:$0xff]
        %v438 = vld [vmem:[%s433 + $0x30] sm:$0xff]
        %v439 = vld [vmem:[%s433 + $0x38] sm:$0xff]
        %v440 = vld [vmem:[%s433 + $0x48] sm:$0xff]
        %v441 = vld [vmem:[%s433 + $0x50] sm:$0xff]
        %v442 = vld [vmem:[%s433 + $0x60] sm:$0xff]
        %v443 = vld [vmem:[%s433 + $0x68] sm:$0xff]
        %v444 = vld [vmem:[%s433 + $0x78] sm:$0xff]
        %v445 = vld [vmem:[%s433 + $0x80] sm:$0xff]
        %v446 = vld [vmem:[%s433 + $0x90] sm:$0xff]
        %v447 = vld [vmem:[%s433 + $0x98] sm:$0xff]
        %v448 = vld [vmem:[%s433 + $0xa8] sm:$0xff]
        %v449 = vld [vmem:[%s433 + $0xb0] sm:$0xff]
        %v450 = vld [vmem:[#allocation6] sm:$0x1]
        %v451 = vlaneseq
        %v452 = vshrl.u32 %v451, 7
        %v453 = vsub.s32 0, %v452
        %v454 = vrot.slane %v450, %v453
        %v455 = vmul.f32 %v434, %v454
        %v456 = vmul.f32 %v435, %v454
        %v457 = vmul.f32 %v436, %v454
        %v458 = vmul.f32 %v437, %v454
        %v459 = vmul.f32 %v438, %v454
        %v460 = vmul.f32 %v439, %v454
        %v461 = vmul.f32 %v440, %v454
        %v462 = vmul.f32 %v441, %v454
        %v463 = vmul.f32 %v442, %v454
        %v464 = vmul.f32 %v443, %v454
        %v465 = vmul.f32 %v444, %v454
        %v466 = vmul.f32 %v445, %v454
        %v467 = vmul.f32 %v446, %v454
        %v468 = vmul.f32 %v447, %v454
        %v469 = vmul.f32 %v448, %v454
        %v470 = vmul.f32 %v449, %v454
        %v471 = vadd.f32 %v430, %v455
        %v472 = vadd.f32 %v430, %v456
        %v473 = vadd.f32 %v430, %v457
        %v474 = vadd.f32 %v430, %v458
        %v475 = vadd.f32 %v430, %v459
        %v476 = vadd.f32 %v430, %v460
        %v477 = vadd.f32 %v430, %v461
        %v478 = vadd.f32 %v430, %v462
        %v479 = vadd.f32 %v430, %v463
        %v480 = vadd.f32 %v430, %v464
        %v481 = vadd.f32 %v430, %v465
        %v482 = vadd.f32 %v430, %v466
        %v483 = vadd.f32 %v430, %v467
        %v484 = vadd.f32 %v430, %v468
        %v485 = vadd.f32 %v430, %v469
        %v486 = vadd.f32 %v430, %v470
        %v487 = vld [vmem:[%s433 + $0x1] sm:$0xff]
        %v488 = vld [vmem:[%s433 + $0x9] sm:$0xff]
        %v489 = vld [vmem:[%s433 + $0x19] sm:$0xff]
        %v490 = vld [vmem:[%s433 + $0x21] sm:$0xff]
        %v491 = vld [vmem:[%s433 + $0x31] sm:$0xff]
        %v492 = vld [vmem:[%s433 + $0x39] sm:$0xff]
        %v493 = vld [vmem:[%s433 + $0x49] sm:$0xff]
        %v494 = vld [vmem:[%s433 + $0x51] sm:$0xff]
        %v495 = vld [vmem:[%s433 + $0x61] sm:$0xff]
        %v496 = vld [vmem:[%s433 + $0x69] sm:$0xff]
        %v497 = vld [vmem:[%s433 + $0x79] sm:$0xff]
        %v498 = vld [vmem:[%s433 + $0x81] sm:$0xff]
        %v499 = vld [vmem:[%s433 + $0x91] sm:$0xff]
        %v500 = vld [vmem:[%s433 + $0x99] sm:$0xff]
        %v501 = vld [vmem:[%s433 + $0xa9] sm:$0xff]
        %v502 = vld [vmem:[%s433 + $0xb1] sm:$0xff]
        %v503 = vld [vmem:[#allocation6 + $0x1] sm:$0x1]
        %v504 = vlaneseq
        %v505 = vshrl.u32 %v504, 7
        %v506 = vsub.s32 0, %v505
        %v507 = vrot.slane %v503, %v506
        %v508 = vmul.f32 %v487, %v507
        %v509 = vmul.f32 %v488, %v507
        %v510 = vmul.f32 %v489, %v507
        %v511 = vmul.f32 %v490, %v507
        %v512 = vmul.f32 %v491, %v507
        %v513 = vmul.f32 %v492, %v507
        %v514 = vmul.f32 %v493, %v507
        %v515 = vmul.f32 %v494, %v507
        %v516 = vmul.f32 %v495, %v507
        %v517 = vmul.f32 %v496, %v507
        %v518 = vmul.f32 %v497, %v507
        %v519 = vmul.f32 %v498, %v507
        %v520 = vmul.f32 %v499, %v507
        %v521 = vmul.f32 %v500, %v507
        %v522 = vmul.f32 %v501, %v507
        %v523 = vmul.f32 %v502, %v507
        %v524 = vadd.f32 %v471, %v508
        %v525 = vadd.f32 %v472, %v509
        %v526 = vadd.f32 %v473, %v510
        %v527 = vadd.f32 %v474, %v511
        %v528 = vadd.f32 %v475, %v512
        %v529 = vadd.f32 %v476, %v513
        %v530 = vadd.f32 %v477, %v514
        %v531 = vadd.f32 %v478, %v515
        %v532 = vadd.f32 %v479, %v516
        %v533 = vadd.f32 %v480, %v517
        %v534 = vadd.f32 %v481, %v518
        %v535 = vadd.f32 %v482, %v519
        %v536 = vadd.f32 %v483, %v520
        %v537 = vadd.f32 %v484, %v521
        %v538 = vadd.f32 %v485, %v522
        %v539 = vadd.f32 %v486, %v523
        %v540 = vld [vmem:[%s433 + $0x2] sm:$0xff]
        %v541 = vld [vmem:[%s433 + $0xa] sm:$0xff]
        %v542 = vld [vmem:[%s433 + $0x1a] sm:$0xff]
        %v543 = vld [vmem:[%s433 + $0x22] sm:$0xff]
        %v544 = vld [vmem:[%s433 + $0x32] sm:$0xff]
        %v545 = vld [vmem:[%s433 + $0x3a] sm:$0xff]
        %v546 = vld [vmem:[%s433 + $0x4a] sm:$0xff]
        %v547 = vld [vmem:[%s433 + $0x52] sm:$0xff]
        %v548 = vld [vmem:[%s433 + $0x62] sm:$0xff]
        %v549 = vld [vmem:[%s433 + $0x6a] sm:$0xff]
        %v550 = vld [vmem:[%s433 + $0x7a] sm:$0xff]
        %v551 = vld [vmem:[%s433 + $0x82] sm:$0xff]
        %v552 = vld [vmem:[%s433 + $0x92] sm:$0xff]
        %v553 = vld [vmem:[%s433 + $0x9a] sm:$0xff]
        %v554 = vld [vmem:[%s433 + $0xaa] sm:$0xff]
        %v555 = vld [vmem:[%s433 + $0xb2] sm:$0xff]
        %v556 = vld [vmem:[#allocation6 + $0x2] sm:$0x1]
        %v557 = vlaneseq
        %v558 = vshrl.u32 %v557, 7
        %v559 = vsub.s32 0, %v558
        %v560 = vrot.slane %v556, %v559
        %v561 = vmul.f32 %v540, %v560
        %v562 = vmul.f32 %v541, %v560
        %v563 = vmul.f32 %v542, %v560
        %v564 = vmul.f32 %v543, %v560
        %v565 = vmul.f32 %v544, %v560
        %v566 = vmul.f32 %v545, %v560
        %v567 = vmul.f32 %v546, %v560
        %v568 = vmul.f32 %v547, %v560
        %v569 = vmul.f32 %v548, %v560
        %v570 = vmul.f32 %v549, %v560
        %v571 = vmul.f32 %v550, %v560
        %v572 = vmul.f32 %v551, %v560
        %v573 = vmul.f32 %v552, %v560
        %v574 = vmul.f32 %v553, %v560
        %v575 = vmul.f32 %v554, %v560
        %v576 = vmul.f32 %v555, %v560
        %v577 = vadd.f32 %v524, %v561
        %v578 = vadd.f32 %v525, %v562
        %v579 = vadd.f32 %v526, %v563
        %v580 = vadd.f32 %v527, %v564
        %v581 = vadd.f32 %v528, %v565
        %v582 = vadd.f32 %v529, %v566
        %v583 = vadd.f32 %v530, %v567
        %v584 = vadd.f32 %v531, %v568
        %v585 = vadd.f32 %v532, %v569
        %v586 = vadd.f32 %v533, %v570
        %v587 = vadd.f32 %v534, %v571
        %v588 = vadd.f32 %v535, %v572
        %v589 = vadd.f32 %v536, %v573
        %v590 = vadd.f32 %v537, %v574
        %v591 = vadd.f32 %v538, %v575
        %v592 = vadd.f32 %v539, %v576
        %s593 = sadd.s32 %s424, 1
        %s594 = smul.u32 %s593, 24
        %s595 = scalar_lea.vmem [#allocation2], %s594
        %v596 = vld [vmem:[%s595] sm:$0xff]
        %v597 = vld [vmem:[%s595 + $0x8] sm:$0xff]
        %v598 = vld [vmem:[%s595 + $0x18] sm:$0xff]
        %v599 = vld [vmem:[%s595 + $0x20] sm:$0xff]
        %v600 = vld [vmem:[%s595 + $0x30] sm:$0xff]
        %v601 = vld [vmem:[%s595 + $0x38] sm:$0xff]
        %v602 = vld [vmem:[%s595 + $0x48] sm:$0xff]
        %v603 = vld [vmem:[%s595 + $0x50] sm:$0xff]
        %v604 = vld [vmem:[%s595 + $0x60] sm:$0xff]
        %v605 = vld [vmem:[%s595 + $0x68] sm:$0xff]
        %v606 = vld [vmem:[%s595 + $0x78] sm:$0xff]
        %v607 = vld [vmem:[%s595 + $0x80] sm:$0xff]
        %v608 = vld [vmem:[%s595 + $0x90] sm:$0xff]
        %v609 = vld [vmem:[%s595 + $0x98] sm:$0xff]
        %v610 = vld [vmem:[%s595 + $0xa8] sm:$0xff]
        %v611 = vld [vmem:[%s595 + $0xb0] sm:$0xff]
        %v612 = vld [vmem:[#allocation6 + $0x3] sm:$0x1]
        %v613 = vlaneseq
        %v614 = vshrl.u32 %v613, 7
        %v615 = vsub.s32 0, %v614
        %v616 = vrot.slane %v612, %v615
        %v617 = vmul.f32 %v596, %v616
        %v618 = vmul.f32 %v597, %v616
        %v619 = vmul.f32 %v598, %v616
        %v620 = vmul.f32 %v599, %v616
        %v621 = vmul.f32 %v600, %v616
        %v622 = vmul.f32 %v601, %v616
        %v623 = vmul.f32 %v602, %v616
        %v624 = vmul.f32 %v603, %v616
        %v625 = vmul.f32 %v604, %v616
        %v626 = vmul.f32 %v605, %v616
        %v627 = vmul.f32 %v606, %v616
        %v628 = vmul.f32 %v607, %v616
        %v629 = vmul.f32 %v608, %v616
        %v630 = vmul.f32 %v609, %v616
        %v631 = vmul.f32 %v610, %v616
        %v632 = vmul.f32 %v611, %v616
        %v633 = vadd.f32 %v577, %v617
        %v634 = vadd.f32 %v578, %v618
        %v635 = vadd.f32 %v579, %v619
        %v636 = vadd.f32 %v580, %v620
        %v637 = vadd.f32 %v581, %v621
        %v638 = vadd.f32 %v582, %v622
        %v639 = vadd.f32 %v583, %v623
        %v640 = vadd.f32 %v584, %v624
        %v641 = vadd.f32 %v585, %v625
        %v642 = vadd.f32 %v586, %v626
        %v643 = vadd.f32 %v587, %v627
        %v644 = vadd.f32 %v588, %v628
        %v645 = vadd.f32 %v589, %v629
        %v646 = vadd.f32 %v590, %v630
        %v647 = vadd.f32 %v591, %v631
        %v648 = vadd.f32 %v592, %v632
        %v649 = vld [vmem:[%s595 + $0x1] sm:$0xff]
        %v650 = vld [vmem:[%s595 + $0x9] sm:$0xff]
        %v651 = vld [vmem:[%s595 + $0x19] sm:$0xff]
        %v652 = vld [vmem:[%s595 + $0x21] sm:$0xff]
        %v653 = vld [vmem:[%s595 + $0x31] sm:$0xff]
        %v654 = vld [vmem:[%s595 + $0x39] sm:$0xff]
        %v655 = vld [vmem:[%s595 + $0x49] sm:$0xff]
        %v656 = vld [vmem:[%s595 + $0x51] sm:$0xff]
        %v657 = vld [vmem:[%s595 + $0x61] sm:$0xff]
        %v658 = vld [vmem:[%s595 + $0x69] sm:$0xff]
        %v659 = vld [vmem:[%s595 + $0x79] sm:$0xff]
        %v660 = vld [vmem:[%s595 + $0x81] sm:$0xff]
        %v661 = vld [vmem:[%s595 + $0x91] sm:$0xff]
        %v662 = vld [vmem:[%s595 + $0x99] sm:$0xff]
        %v663 = vld [vmem:[%s595 + $0xa9] sm:$0xff]
        %v664 = vld [vmem:[%s595 + $0xb1] sm:$0xff]
        %v665 = vld [vmem:[#allocation6 + $0x4] sm:$0x1]
        %v666 = vlaneseq
        %v667 = vshrl.u32 %v666, 7
        %v668 = vsub.s32 0, %v667
        %v669 = vrot.slane %v665, %v668
        %v670 = vmul.f32 %v649, %v669
        %v671 = vmul.f32 %v650, %v669
        %v672 = vmul.f32 %v651, %v669
        %v673 = vmul.f32 %v652, %v669
        %v674 = vmul.f32 %v653, %v669
        %v675 = vmul.f32 %v654, %v669
        %v676 = vmul.f32 %v655, %v669
        %v677 = vmul.f32 %v656, %v669
        %v678 = vmul.f32 %v657, %v669
        %v679 = vmul.f32 %v658, %v669
        %v680 = vmul.f32 %v659, %v669
        %v681 = vmul.f32 %v660, %v669
        %v682 = vmul.f32 %v661, %v669
        %v683 = vmul.f32 %v662, %v669
        %v684 = vmul.f32 %v663, %v669
        %v685 = vmul.f32 %v664, %v669
        %v686 = vadd.f32 %v633, %v670
        %v687 = vadd.f32 %v634, %v671
        %v688 = vadd.f32 %v635, %v672
        %v689 = vadd.f32 %v636, %v673
        %v690 = vadd.f32 %v637, %v674
        %v691 = vadd.f32 %v638, %v675
        %v692 = vadd.f32 %v639, %v676
        %v693 = vadd.f32 %v640, %v677
        %v694 = vadd.f32 %v641, %v678
        %v695 = vadd.f32 %v642, %v679
        %v696 = vadd.f32 %v643, %v680
        %v697 = vadd.f32 %v644, %v681
        %v698 = vadd.f32 %v645, %v682
        %v699 = vadd.f32 %v646, %v683
        %v700 = vadd.f32 %v647, %v684
        %v701 = vadd.f32 %v648, %v685
        %v702 = vld [vmem:[%s595 + $0x2] sm:$0xff]
        %v703 = vld [vmem:[%s595 + $0xa] sm:$0xff]
        %v704 = vld [vmem:[%s595 + $0x1a] sm:$0xff]
        %v705 = vld [vmem:[%s595 + $0x22] sm:$0xff]
        %v706 = vld [vmem:[%s595 + $0x32] sm:$0xff]
        %v707 = vld [vmem:[%s595 + $0x3a] sm:$0xff]
        %v708 = vld [vmem:[%s595 + $0x4a] sm:$0xff]
        %v709 = vld [vmem:[%s595 + $0x52] sm:$0xff]
        %v710 = vld [vmem:[%s595 + $0x62] sm:$0xff]
        %v711 = vld [vmem:[%s595 + $0x6a] sm:$0xff]
        %v712 = vld [vmem:[%s595 + $0x7a] sm:$0xff]
        %v713 = vld [vmem:[%s595 + $0x82] sm:$0xff]
        %v714 = vld [vmem:[%s595 + $0x92] sm:$0xff]
        %v715 = vld [vmem:[%s595 + $0x9a] sm:$0xff]
        %v716 = vld [vmem:[%s595 + $0xaa] sm:$0xff]
        %v717 = vld [vmem:[%s595 + $0xb2] sm:$0xff]
        %v718 = vld [vmem:[#allocation6 + $0x5] sm:$0x1]
        %v719 = vlaneseq
        %v720 = vshrl.u32 %v719, 7
        %v721 = vsub.s32 0, %v720
        %v722 = vrot.slane %v718, %v721
        %v723 = vmul.f32 %v702, %v722
        %v724 = vmul.f32 %v703, %v722
        %v725 = vmul.f32 %v704, %v722
        %v726 = vmul.f32 %v705, %v722
        %v727 = vmul.f32 %v706, %v722
        %v728 = vmul.f32 %v707, %v722
        %v729 = vmul.f32 %v708, %v722
        %v730 = vmul.f32 %v709, %v722
        %v731 = vmul.f32 %v710, %v722
        %v732 = vmul.f32 %v711, %v722
        %v733 = vmul.f32 %v712, %v722
        %v734 = vmul.f32 %v713, %v722
        %v735 = vmul.f32 %v714, %v722
        %v736 = vmul.f32 %v715, %v722
        %v737 = vmul.f32 %v716, %v722
        %v738 = vmul.f32 %v717, %v722
        %v739 = vadd.f32 %v686, %v723
        %v740 = vadd.f32 %v687, %v724
        %v741 = vadd.f32 %v688, %v725
        %v742 = vadd.f32 %v689, %v726
        %v743 = vadd.f32 %v690, %v727
        %v744 = vadd.f32 %v691, %v728
        %v745 = vadd.f32 %v692, %v729
        %v746 = vadd.f32 %v693, %v730
        %v747 = vadd.f32 %v694, %v731
        %v748 = vadd.f32 %v695, %v732
        %v749 = vadd.f32 %v696, %v733
        %v750 = vadd.f32 %v697, %v734
        %v751 = vadd.f32 %v698, %v735
        %v752 = vadd.f32 %v699, %v736
        %v753 = vadd.f32 %v700, %v737
        %v754 = vadd.f32 %v701, %v738
        %s755 = sadd.s32 %s424, 2
        %s756 = smul.u32 %s755, 24
        %s757 = scalar_lea.vmem [#allocation2], %s756
        %v758 = vld [vmem:[%s757] sm:$0xff]
        %v759 = vld [vmem:[%s757 + $0x8] sm:$0xff]
        %v760 = vld [vmem:[%s757 + $0x18] sm:$0xff]
        %v761 = vld [vmem:[%s757 + $0x20] sm:$0xff]
        %v762 = vld [vmem:[%s757 + $0x30] sm:$0xff]
        %v763 = vld [vmem:[%s757 + $0x38] sm:$0xff]
        %v764 = vld [vmem:[%s757 + $0x48] sm:$0xff]
        %v765 = vld [vmem:[%s757 + $0x50] sm:$0xff]
        %v766 = vld [vmem:[%s757 + $0x60] sm:$0xff]
        %v767 = vld [vmem:[%s757 + $0x68] sm:$0xff]
        %v768 = vld [vmem:[%s757 + $0x78] sm:$0xff]
        %v769 = vld [vmem:[%s757 + $0x80] sm:$0xff]
        %v770 = vld [vmem:[%s757 + $0x90] sm:$0xff]
        %v771 = vld [vmem:[%s757 + $0x98] sm:$0xff]
        %v772 = vld [vmem:[%s757 + $0xa8] sm:$0xff]
        %v773 = vld [vmem:[%s757 + $0xb0] sm:$0xff]
        %v774 = vld [vmem:[#allocation6 + $0x6] sm:$0x1]
        %v775 = vlaneseq
        %v776 = vshrl.u32 %v775, 7
        %v777 = vsub.s32 0, %v776
        %v778 = vrot.slane %v774, %v777
        %v779 = vmul.f32 %v758, %v778
        %v780 = vmul.f32 %v759, %v778
        %v781 = vmul.f32 %v760, %v778
        %v782 = vmul.f32 %v761, %v778
        %v783 = vmul.f32 %v762, %v778
        %v784 = vmul.f32 %v763, %v778
        %v785 = vmul.f32 %v764, %v778
        %v786 = vmul.f32 %v765, %v778
        %v787 = vmul.f32 %v766, %v778
        %v788 = vmul.f32 %v767, %v778
        %v789 = vmul.f32 %v768, %v778
        %v790 = vmul.f32 %v769, %v778
        %v791 = vmul.f32 %v770, %v778
        %v792 = vmul.f32 %v771, %v778
        %v793 = vmul.f32 %v772, %v778
        %v794 = vmul.f32 %v773, %v778
        %v795 = vadd.f32 %v739, %v779
        %v796 = vadd.f32 %v740, %v780
        %v797 = vadd.f32 %v741, %v781
        %v798 = vadd.f32 %v742, %v782
        %v799 = vadd.f32 %v743, %v783
        %v800 = vadd.f32 %v744, %v784
        %v801 = vadd.f32 %v745, %v785
        %v802 = vadd.f32 %v746, %v786
        %v803 = vadd.f32 %v747, %v787
        %v804 = vadd.f32 %v748, %v788
        %v805 = vadd.f32 %v749, %v789
        %v806 = vadd.f32 %v750, %v790
        %v807 = vadd.f32 %v751, %v791
        %v808 = vadd.f32 %v752, %v792
        %v809 = vadd.f32 %v753, %v793
        %v810 = vadd.f32 %v754, %v794
        %v811 = vld [vmem:[%s757 + $0x1] sm:$0xff]
        %v812 = vld [vmem:[%s757 + $0x9] sm:$0xff]
        %v813 = vld [vmem:[%s757 + $0x19] sm:$0xff]
        %v814 = vld [vmem:[%s757 + $0x21] sm:$0xff]
        %v815 = vld [vmem:[%s757 + $0x31] sm:$0xff]
        %v816 = vld [vmem:[%s757 + $0x39] sm:$0xff]
        %v817 = vld [vmem:[%s757 + $0x49] sm:$0xff]
        %v818 = vld [vmem:[%s757 + $0x51] sm:$0xff]
        %v819 = vld [vmem:[%s757 + $0x61] sm:$0xff]
        %v820 = vld [vmem:[%s757 + $0x69] sm:$0xff]
        %v821 = vld [vmem:[%s757 + $0x79] sm:$0xff]
        %v822 = vld [vmem:[%s757 + $0x81] sm:$0xff]
        %v823 = vld [vmem:[%s757 + $0x91] sm:$0xff]
        %v824 = vld [vmem:[%s757 + $0x99] sm:$0xff]
        %v825 = vld [vmem:[%s757 + $0xa9] sm:$0xff]
        %v826 = vld [vmem:[%s757 + $0xb1] sm:$0xff]
        %v827 = vld [vmem:[#allocation6 + $0x7] sm:$0x1]
        %v828 = vlaneseq
        %v829 = vshrl.u32 %v828, 7
        %v830 = vsub.s32 0, %v829
        %v831 = vrot.slane %v827, %v830
        %v832 = vmul.f32 %v811, %v831
        %v833 = vmul.f32 %v812, %v831
        %v834 = vmul.f32 %v813, %v831
        %v835 = vmul.f32 %v814, %v831
        %v836 = vmul.f32 %v815, %v831
        %v837 = vmul.f32 %v816, %v831
        %v838 = vmul.f32 %v817, %v831
        %v839 = vmul.f32 %v818, %v831
        %v840 = vmul.f32 %v819, %v831
        %v841 = vmul.f32 %v820, %v831
        %v842 = vmul.f32 %v821, %v831
        %v843 = vmul.f32 %v822, %v831
        %v844 = vmul.f32 %v823, %v831
        %v845 = vmul.f32 %v824, %v831
        %v846 = vmul.f32 %v825, %v831
        %v847 = vmul.f32 %v826, %v831
        %v848 = vadd.f32 %v795, %v832
        %v849 = vadd.f32 %v796, %v833
        %v850 = vadd.f32 %v797, %v834
        %v851 = vadd.f32 %v798, %v835
        %v852 = vadd.f32 %v799, %v836
        %v853 = vadd.f32 %v800, %v837
        %v854 = vadd.f32 %v801, %v838
        %v855 = vadd.f32 %v802, %v839
        %v856 = vadd.f32 %v803, %v840
        %v857 = vadd.f32 %v804, %v841
        %v858 = vadd.f32 %v805, %v842
        %v859 = vadd.f32 %v806, %v843
        %v860 = vadd.f32 %v807, %v844
        %v861 = vadd.f32 %v808, %v845
        %v862 = vadd.f32 %v809, %v846
        %v863 = vadd.f32 %v810, %v847
        %v864 = vld [vmem:[%s757 + $0x2] sm:$0xff]
        %v865 = vld [vmem:[%s757 + $0xa] sm:$0xff]
        %v866 = vld [vmem:[%s757 + $0x1a] sm:$0xff]
        %v867 = vld [vmem:[%s757 + $0x22] sm:$0xff]
        %v868 = vld [vmem:[%s757 + $0x32] sm:$0xff]
        %v869 = vld [vmem:[%s757 + $0x3a] sm:$0xff]
        %v870 = vld [vmem:[%s757 + $0x4a] sm:$0xff]
        %v871 = vld [vmem:[%s757 + $0x52] sm:$0xff]
        %v872 = vld [vmem:[%s757 + $0x62] sm:$0xff]
        %v873 = vld [vmem:[%s757 + $0x6a] sm:$0xff]
        %v874 = vld [vmem:[%s757 + $0x7a] sm:$0xff]
        %v875 = vld [vmem:[%s757 + $0x82] sm:$0xff]
        %v876 = vld [vmem:[%s757 + $0x92] sm:$0xff]
        %v877 = vld [vmem:[%s757 + $0x9a] sm:$0xff]
        %v878 = vld [vmem:[%s757 + $0xaa] sm:$0xff]
        %v879 = vld [vmem:[%s757 + $0xb2] sm:$0xff]
        %v880 = vld [vmem:[#allocation6 + $0x8] sm:$0x1]
        %v881 = vlaneseq
        %v882 = vshrl.u32 %v881, 7
        %v883 = vsub.s32 0, %v882
        %v884 = vrot.slane %v880, %v883
        %v885 = vmul.f32 %v864, %v884
        %v886 = vmul.f32 %v865, %v884
        %v887 = vmul.f32 %v866, %v884
        %v888 = vmul.f32 %v867, %v884
        %v889 = vmul.f32 %v868, %v884
        %v890 = vmul.f32 %v869, %v884
        %v891 = vmul.f32 %v870, %v884
        %v892 = vmul.f32 %v871, %v884
        %v893 = vmul.f32 %v872, %v884
        %v894 = vmul.f32 %v873, %v884
        %v895 = vmul.f32 %v874, %v884
        %v896 = vmul.f32 %v875, %v884
        %v897 = vmul.f32 %v876, %v884
        %v898 = vmul.f32 %v877, %v884
        %v899 = vmul.f32 %v878, %v884
        %v900 = vmul.f32 %v879, %v884
        %v901 = vadd.f32 %v848, %v885
        %v902 = vadd.f32 %v849, %v886
        %v903 = vadd.f32 %v850, %v887
        %v904 = vadd.f32 %v851, %v888
        %v905 = vadd.f32 %v852, %v889
        %v906 = vadd.f32 %v853, %v890
        %v907 = vadd.f32 %v854, %v891
        %v908 = vadd.f32 %v855, %v892
        %v909 = vadd.f32 %v856, %v893
        %v910 = vadd.f32 %v857, %v894
        %v911 = vadd.f32 %v858, %v895
        %v912 = vadd.f32 %v859, %v896
        %v913 = vadd.f32 %v860, %v897
        %v914 = vadd.f32 %v861, %v898
        %v915 = vadd.f32 %v862, %v899
        %v916 = vadd.f32 %v863, %v900
        %v917 = vpack.c.bf16 %v902, %v901
        %v918 = vpack.c.bf16 %v904, %v903
        %v919 = vpack.c.bf16 %v906, %v905
        %v920 = vpack.c.bf16 %v908, %v907
        %v921 = vpack.c.bf16 %v910, %v909
        %v922 = vpack.c.bf16 %v912, %v911
        %v923 = vpack.c.bf16 %v914, %v913
        %v924 = vpack.c.bf16 %v916, %v915
        %v925 = vld [vmem:[#allocation8] sm:$0xf]
        %v926 = vld [vmem:[#allocation8 + $0x4] sm:$0xf]
        %v927 = vld [vmem:[#allocation8 + $0x8] sm:$0xf]
        %v928 = vld [vmem:[#allocation8 + $0xc] sm:$0xf]
        %v929 = vld [vmem:[#allocation8 + $0x10] sm:$0xf]
        %v930 = vld [vmem:[#allocation8 + $0x14] sm:$0xf]
        %v931 = vld [vmem:[#allocation8 + $0x18] sm:$0xf]
        %v932 = vld [vmem:[#allocation8 + $0x1c] sm:$0xf]
        %v933 = vld [vmem:[%s4] sm:$0x1]
        %v935 = vlaneseq
        %v936 = vshrl.u32 %v935, 7
        %v937 = vsub.s32 0, %v936
        %v938 = vrot.slane %v933, %v937
        %v948 = vunpack.c.l.b16 %v925
        %v949 = vunpack.c.l.b16 %v926
        %v950 = vunpack.c.l.b16 %v927
        %v951 = vunpack.c.l.b16 %v928
        %v952 = vunpack.c.l.b16 %v929
        %v953 = vunpack.c.l.b16 %v930
        %v954 = vunpack.c.l.b16 %v931
        %v955 = vunpack.c.l.b16 %v932
        %v956 = vpack.c.b16 %v949, %v948
        %v957 = vpack.c.b16 %v951, %v950
        %v958 = vpack.c.b16 %v953, %v952
        %v959 = vpack.c.b16 %v955, %v954
        %v965 = vsel %vm271, %v917, 0
        %v968 = vsel %vm271, %v918, 0
        %v971 = vsel %vm271, %v919, 0
        %v974 = vsel %vm271, %v920, 0
        %v977 = vsel %vm271, %v921, 0
        %v980 = vsel %vm271, %v922, 0
        %v983 = vsel %vm271, %v923, 0
        %v986 = vsel %vm271, %v924, 0
        %988 = vmatprep.subr.bf16.mxu0 0
        %989 = vmatpush1.bf16.msra.mxu0 0
        %990 = vmatprep.subr.bf16.mxu0 0
        %991 = vmatpush1.bf16.msra.mxu0 0
        %992 = vmatprep.subr.bf16.mxu0 0
        %993 = vmatpush1.bf16.msra.mxu0 0
        %994 = vmatprep.subr.bf16.mxu0 0
        %995 = vmatpush1.bf16.msra.mxu0 0
        %996 = vmatprep.subr.bf16.mxu0 0
        %997 = vmatpush1.bf16.msra.mxu0 %v959
        %998 = vmatprep.subr.bf16.mxu0 0
        %999 = vmatpush1.bf16.msra.mxu0 %v958
        %1000 = vmatprep.subr.bf16.mxu0 0
        %1001 = vmatpush1.bf16.msra.mxu0 %v957
        %1002 = vmatprep.subr.bf16.mxu0 0
        %1003 = vmatpush1.bf16.msra.mxu0 %v956
        %1004 = vmatprep.subr.bf16.mxu0 0
        %1005 = vmatpush2.bf16.msra.mxu0 0
        %1006 = vmatprep.subr.bf16.mxu0 0
        %1007 = vmatpush2.bf16.msra.mxu0 0
        %1008 = vmatprep.subr.bf16.mxu0 0
        %1009 = vmatpush2.bf16.msra.mxu0 0
        %1010 = vmatprep.subr.bf16.mxu0 0
        %1011 = vmatpush2.bf16.msra.mxu0 0
        %1012 = vmatprep.subr.bf16.mxu0 0
        %1013 = vmatpush2.bf16.msra.mxu0 0
        %1014 = vmatprep.subr.bf16.mxu0 0
        %1015 = vmatpush2.bf16.msra.mxu0 0
        %1016 = vmatprep.subr.bf16.mxu0 0
        %1017 = vmatpush2.bf16.msra.mxu0 0
        %1018 = vmatprep.subr.bf16.mxu0 0
        %1019 = vmatpush2.bf16.msra.mxu0 0
        %1020 = vmatprep.mubr.bf16.mxu0 0
        %1021 = vmatmul.mubr.bf16.gmra.mxu0 %v965
        %v1022 = vpop.f32.mrf.mxu0
        %v1023 = vadd.f32 %v938, %v1022
        %v1024 = vpop.f32.mrf.mxu0
        %v1025 = vpop.f32.mrf.mxu0
        %v1026 = vadd.f32 %v938, %v1025
        %v1027 = vpop.f32.mrf.mxu0
        %1028 = vmatprep.mubr.bf16.mxu0 0
        %1029 = vmatmul.mubr.bf16.gmra.mxu0 %v968
        %v1030 = vpop.f32.mrf.mxu0
        %v1031 = vadd.f32 %v938, %v1030
        %v1032 = vpop.f32.mrf.mxu0
        %v1033 = vpop.f32.mrf.mxu0
        %v1034 = vadd.f32 %v938, %v1033
        %v1035 = vpop.f32.mrf.mxu0
        %1036 = vmatprep.mubr.bf16.mxu0 0
        %1037 = vmatmul.mubr.bf16.gmra.mxu0 %v971
        %v1038 = vpop.f32.mrf.mxu0
        %v1039 = vadd.f32 %v938, %v1038
        %v1040 = vpop.f32.mrf.mxu0
        %v1041 = vpop.f32.mrf.mxu0
        %v1042 = vadd.f32 %v938, %v1041
        %v1043 = vpop.f32.mrf.mxu0
        %1044 = vmatprep.mubr.bf16.mxu0 0
        %1045 = vmatmul.mubr.bf16.gmra.mxu0 %v974
        %v1046 = vpop.f32.mrf.mxu0
        %v1047 = vadd.f32 %v938, %v1046
        %v1048 = vpop.f32.mrf.mxu0
        %v1049 = vpop.f32.mrf.mxu0
        %v1050 = vadd.f32 %v938, %v1049
        %v1051 = vpop.f32.mrf.mxu0
        %1052 = vmatprep.mubr.bf16.mxu0 0
        %1053 = vmatmul.mubr.bf16.gmra.mxu0 %v977
        %v1054 = vpop.f32.mrf.mxu0
        %v1055 = vadd.f32 %v938, %v1054
        %v1056 = vpop.f32.mrf.mxu0
        %v1057 = vpop.f32.mrf.mxu0
        %v1058 = vadd.f32 %v938, %v1057
        %v1059 = vpop.f32.mrf.mxu0
        %1060 = vmatprep.mubr.bf16.mxu0 0
        %1061 = vmatmul.mubr.bf16.gmra.mxu0 %v980
        %v1062 = vpop.f32.mrf.mxu0
        %v1063 = vadd.f32 %v938, %v1062
        %v1064 = vpop.f32.mrf.mxu0
        %v1065 = vpop.f32.mrf.mxu0
        %v1066 = vadd.f32 %v938, %v1065
        %v1067 = vpop.f32.mrf.mxu0
        %1068 = vmatprep.mubr.bf16.mxu0 0
        %1069 = vmatmul.mubr.bf16.gmra.mxu0 %v983
        %v1070 = vpop.f32.mrf.mxu0
        %v1071 = vadd.f32 %v938, %v1070
        %v1072 = vpop.f32.mrf.mxu0
        %v1073 = vpop.f32.mrf.mxu0
        %v1074 = vadd.f32 %v938, %v1073
        %v1075 = vpop.f32.mrf.mxu0
        %1076 = vmatprep.mubr.bf16.mxu0 0
        %1077 = vmatmul.mubr.bf16.gmra.mxu0 %v986
        %v1078 = vpop.f32.mrf.mxu0
        %v1079 = vadd.f32 %v938, %v1078
        %v1080 = vpop.f32.mrf.mxu0
        %v1081 = vpop.f32.mrf.mxu0
        %v1082 = vadd.f32 %v938, %v1081
        %v1083 = vpop.f32.mrf.mxu0
        %1084 = vdwg.mxu0
        %1085 = vst [vmem:[%s268] sm:$0xff] %v1023
        %1086 = vst [vmem:[%s268 + $0x8] sm:$0xff] %v1026
        %1087 = vst [vmem:[%s268 + $0x10] sm:$0xff] %v1031
        %1088 = vst [vmem:[%s268 + $0x18] sm:$0xff] %v1034
        %1089 = vst [vmem:[%s268 + $0x20] sm:$0xff] %v1039
        %1090 = vst [vmem:[%s268 + $0x28] sm:$0xff] %v1042
        %1091 = vst [vmem:[%s268 + $0x30] sm:$0xff] %v1047
        %1092 = vst [vmem:[%s268 + $0x38] sm:$0xff] %v1050
        %1093 = vst [vmem:[%s268 + $0x40] sm:$0xff] %v1055
        %1094 = vst [vmem:[%s268 + $0x48] sm:$0xff] %v1058
        %1095 = vst [vmem:[%s268 + $0x50] sm:$0xff] %v1063
        %1096 = vst [vmem:[%s268 + $0x58] sm:$0xff] %v1066
        %1097 = vst [vmem:[%s268 + $0x60] sm:$0xff] %v1071
        %1098 = vst [vmem:[%s268 + $0x68] sm:$0xff] %v1074
        %1099 = vst [vmem:[%s268 + $0x70] sm:$0xff] %v1079
        %1100 = vst [vmem:[%s268 + $0x78] sm:$0xff] %v1082
        %s1101 = sand.u32 %s153, 1
        %s1102 = scalar_lea.sflag [#allocation5], %s1101
        %s1103 = sand.u32 %s153, 1
        %s1104 = smul.addr %s1103, 128
        %s1105 = scalar_lea.vmem [#allocation9], %s1104
        // Predicated region
        $region53: #{tpu_custom_call.1} parent=39 // pred_check
          %p1106 = pneg %p163
        $region54: #{tpu_custom_call.1} parent=39 // pred_check_branch
          %1108 = sbr.rel (%p1106) target = $region56
        $region55: #{tpu_custom_call.1} parent=39 // pred_region
          %s1109 = smul.u32 8, %s26
          %s1111 = ssub.s32 2048, 2048
          %1112 = vsyncadd %s1102, %s1111
          %s1113 = smul.addr %s1109, 2
          %s1114 = smul.addr %s25, 32
          %s1115 = sadd.s32 %s1113, %s1114
          %s1116 = smul.addr %s1115, 128
          %s1117 = scalar_lea.hbm %s5, %s1116
          %s1118 = sshll.u32 %s1105, 4
          %s1119 = int_to_ptr.vmem [resolvable:$true] %s1118
          %1124 = dma.vmem_to_hbm [thread:$0]  %s1119, 2048, %s1117, %s1102, 128, 128, 8
        $region56: #{tpu_custom_call.1} parent=39 // pred_fallthru
          _
      $region40: #{tpu_custom_call.1} parent=5 // pred_fallthru
        _
      %p1125 = scmp.le.s32.totalorder 2, %s16
      // Predicated region
      $region57: #{tpu_custom_call.1} parent=5 // pred_check
        %p1126 = pneg %p1125
      $region58: #{tpu_custom_call.1} parent=5 // pred_check_branch
        %1128 = sbr.rel (%p1126) target = $region60
      $region59: #{tpu_custom_call.1} parent=5 // pred_region
        %s1129 = ssub.s32 %s16, 2
        // Predicated region
        $region61: #{tpu_custom_call.1} parent=59 // pred_check
          %p1130 = pneg %p169
        $region62: #{tpu_custom_call.1} parent=59 // pred_check_branch
          %1132 = sbr.rel (%p1130) target = $region64
        $region63: #{tpu_custom_call.1} parent=59 // pred_region
          %s1133 = sand.u32 %s154, 1
          %s1134 = scalar_lea.sflag [#allocation5], %s1133
          %s1135 = sand.u32 %s154, 1
          %s1136 = smul.addr %s1135, 128
          %s1137 = scalar_lea.vmem [#allocation9], %s1136
          %1138 = dma.done %s1134, 2048
        $region64: #{tpu_custom_call.1} parent=59 // pred_fallthru
          _
      $region60: #{tpu_custom_call.1} parent=5 // pred_fallthru
        _
    $region6: #{tpu_custom_call.1} parent=1 // loop_footer
      %s20 = sadd.s32 1, %s16
    $region7: #{tpu_custom_call.1} parent=1 // loop_footer_branch
      %15 = sbr.rel target = $region3
    $region8: #{tpu_custom_call.1} parent=1 // loop_exit
      _
    %1139 = vsyncpa [#allocation4], 1
    %s1140 = scalar_lea.sflag [#allocation4], 1
    %1141 = vsyncpa %s1140, 1
    %1142 = vsyncpa [#allocation7], 1
    %1143 = vsyncpa [#allocation5], 1
    %s1144 = scalar_lea.sflag [#allocation5], 1
    %1145 = vsyncpa %s1144, 1

</llo_original>
